<compile_context>
chip_gen: v7x
topology: tpu7x:2x2x1
jax: 0.10.0
libtpu: 0.0.40
codegen_flags: <defaults>
</compile_context>

<pallas_src>
import functools
import math

import numpy as np
import jax
import jax.numpy as jnp
from jax import lax
from jax.experimental import pallas as pl
from jax.experimental.pallas import tpu as pltpu

LANE = 128
SUB = 8
GP = 8                # sublane-groups (8 rows each) per inner chunk
TR_MAX = 2048         # rows of 128 lanes per grid step (multiple of SUB*GP)
NEG = -1.0e9          # sentinel: tanh((NEG - edge) * s) == -1.0 exactly -> cancels


def _num_tensorcores():
    """Best-effort TensorCore-per-device count; falls back to 1."""
    try:
        info = pltpu.get_tpu_info()
        for attr in ("num_cores", "num_tensorcores", "tensorcore_count", "core_count"):
            v = getattr(info, attr, None)
            if isinstance(v, int) and v > 0:
                return v
    except Exception:
        pass
    try:
        d = jax.devices()[0]
        for attr in ("num_cores", "core_count"):
            v = getattr(d, attr, None)
            if isinstance(v, int) and v > 0:
                return v
    except Exception:
        pass
    return 1


def _hist_kernel(*refs, edges, pairs, scale, gp, has_mask):
    """Accumulate per-bin tanh-difference sums.

    Grid = (P, row_tiles): row_tiles is the reduction axis ("arbitrary"),
    P is "parallel" (megacore) and owns its own resident output block.

    refs (has_mask=True):  m_ref f32[TR/8,8,128], x_ref f32[3,TR/8,8,128],
                           o_ref f32[K,3,8,128]
    refs (has_mask=False): x_ref, o_ref
    """
    if has_mask:
        m_ref, x_ref, o_ref = refs
    else:
        m_ref = None
        x_ref, o_ref = refs

    t = pl.program_id(1)

    @pl.when(t == 0)
    def _():
        o_ref[...] = jnp.zeros_like(o_ref)

    n_chunks = x_ref.shape[1] // gp

    def chunk_body(g, carry):
        g0 = pl.multiple_of(g * gp, gp)
        xs = x_ref[:, pl.ds(g0, gp), :, :]                    # (3, gp, 8, 128)
        if m_ref is not None:
            valid = m_ref[pl.ds(g0, gp), :, :] > 0.0          # (gp, 8, 128)
            xs = jnp.where(valid[None], xs, NEG)              # sentinel select (VPU)
        xs = xs * scale                                       # hoisted 1/(2W)

        # Static unrolled edge loop: one EUP tanh per edge, reduced over the gp
        # axis with VPU adds, then accumulated into (+ own bin, - previous bin).
        for e in range(len(edges)):
            s = jnp.sum(jnp.tanh(xs - edges[e]), axis=1)      # (3, 8, 128)
            for (b, sign) in pairs[e]:
                if sign > 0:
                    o_ref[b] = o_ref[b] + s
                else:
                    o_ref[b] = o_ref[b] - s
        return carry

    lax.fori_loop(0, n_chunks, chunk_body, 0, unroll=False)


def triple_dim_hist(x, mask=None, *, K, L, W, mu_k):
    """x: (B, 3, H, Ws) NCHW.  mask: optional (B, H, Ws) bool.  -> (1, 3, K) f32."""
    B, C, H, Ws = x.shape
    assert C == 3, "TripleDimHistLayer expects 3 channels"
    n = B * H * Ws

    mu = np.asarray(mu_k, dtype=np.float64).ravel()
    assert mu.shape[0] == K
    half = float(L) / 2.0
    scale = 0.5 / float(W)            # sigmoid(u) = 0.5*(1 + tanh(u * 0.5)) with u=(x-edge)/W

    # Telescoping (K+1 edges) is exact only for bins uniformly spaced by exactly L.
    uniform = bool(np.allclose(np.diff(mu), float(L), rtol=1e-6, atol=1e-9))
    if uniform:
        edges_np = np.concatenate([mu - half, [mu[-1] + half]])            # (K+1,)
        pairs = []
        for e in range(K + 1):
            p = []
            if e < K:
                p.append((e, +1))      # left edge of bin e
            if e > 0:
                p.append((e - 1, -1))  # right edge of bin e-1
            pairs.append(tuple(p))
    else:
        edges_np = np.stack([mu - half, mu + half], axis=1).reshape(-1)    # (2K,) interleaved
        pairs = []
        for k in range(K):
            pairs.append(((k, +1),))
            pairs.append(((k, -1),))
    pairs = tuple(pairs)
    edges = tuple(float(v * scale) for v in edges_np)       # pre-scaled immediates

    # ---- tile geometry -------------------------------------------------------
    R = -(-n // LANE)                                        # rows of 128 lanes
    ncores = _num_tensorcores()
    P = max(1, min(ncores, 2, R // (SUB * GP)))              # don't split tiny work
    rows_per_core = -(-R // P)
    TR = min(TR_MAX, -(-rows_per_core // (SUB * GP)) * (SUB * GP))
    T_inner = -(-rows_per_core // TR)
    R_pad = P * T_inner * TR
    n_pad = R_pad * LANE
    gp = GP if (TR // SUB) % GP == 0 else max(g for g in range(1, GP + 1)
                                              if (TR // SUB) % g == 0)

    # ---- lane-dense relayout of the pixels -----------------------------------
    # TODO(synk): this transpose+pad is the one remaining XLA relayout pass in
    # front of the kernel; indexing NCHW directly would leave vregs mostly empty
    # for narrow images (8x more EUP pushes), so the dense relayout is kept.
    xf = jnp.transpose(x.astype(jnp.float32), (1, 0, 2, 3)).reshape(C, n)
    xp = jnp.pad(xf, ((0, 0), (0, n_pad - n)), constant_values=NEG)
    x4 = xp.reshape(C, R_pad // SUB, SUB, LANE)

    if mask is not None:
        mf = jnp.pad(mask.reshape(n).astype(jnp.float32), (0, n_pad - n))
        m4 = mf.reshape(R_pad // SUB, SUB, LANE)
        cnt = jnp.sum(mf)
        inv_n = jnp.where(cnt > 0, 1.0 / cnt, 0.0).astype(jnp.float32)     # /0 guard
        operands = (m4, x4)
        in_specs = [
            pl.BlockSpec((TR // SUB, SUB, LANE),
                         lambda p, t: (p * T_inner + t, 0, 0)),
            pl.BlockSpec((C, TR // SUB, SUB, LANE),
                         lambda p, t: (0, p * T_inner + t, 0, 0)),
        ]
    else:
        inv_n = jnp.float32(1.0 / n)
        operands = (x4,)
        in_specs = [
            pl.BlockSpec((C, TR // SUB, SUB, LANE),
                         lambda p, t: (0, p * T_inner + t, 0, 0)),
        ]

    kernel = functools.partial(_hist_kernel, edges=edges, pairs=pairs,
                               scale=scale, gp=gp, has_mask=mask is not None)

    partial_sums = pl.pallas_call(
        kernel,
        out_shape=jax.ShapeDtypeStruct((P, K, C, SUB, LANE), jnp.float32),
        grid_spec=pltpu.PrefetchScalarGridSpec(
            num_scalar_prefetch=0,
            grid=(P, T_inner),
            in_specs=in_specs,
            out_specs=pl.BlockSpec((None, K, C, SUB, LANE),
                                   lambda p, t: (p, 0, 0, 0, 0)),
        ),
        compiler_params=pltpu.CompilerParams(
            dimension_semantics=("parallel", "arbitrary")),
    )(*operands)

    # (P, K, 3, 8, 128) -> (K, 3): deferred cross-lane/sublane/core reduction.
    D = jnp.sum(partial_sums, axis=(0, 3, 4))
    hist = D.T * (0.5 * inv_n)        # 0.5 from the sigmoid -> tanh identity
    return hist[None]                 # (1, 3, K)


def _reference(x, mask, K, L, W, mu_k):
    xs = jnp.transpose(x.astype(jnp.float32), (1, 0, 2, 3)).reshape(3, -1)    # (3, N)
    mu = jnp.asarray(mu_k, jnp.float32).reshape(1, K, 1)
    d = xs[:, None, :] - mu                                                   # (3, K, N)
    p = jax.nn.sigmoid((d + L / 2) / W) - jax.nn.sigmoid((d - L / 2) / W)
    if mask is None:
        return (p.sum(-1) / xs.shape[1])[None]                                # (1, 3, K)
    w = mask.reshape(-1).astype(jnp.float32)
    return ((p * w[None, None, :]).sum(-1) / jnp.sum(w))[None]


if __name__ == "__main__":
    # Module parameters: K uniform bins on [0, 1] (matches common usage).
    K = 16
    L = 1.0 / K
    W = L / 2.5
    mu_k = (np.arange(K, dtype=np.float32) + 0.5) * L

    key = jax.random.PRNGKey(0)
    kx, km = jax.random.split(key)
    x = jax.random.uniform(kx, (2, 3, 16, 16), dtype=jnp.float32)  # NCHW

    # mask = None path
    hist = triple_dim_hist(x, mask=None, K=K, L=L, W=W, mu_k=mu_k)
    hist = jax.block_until_ready(hist)
    assert hist.shape == (1, 3, K)
    np.testing.assert_allclose(np.asarray(hist),
                               np.asarray(_reference(x, None, K, L, W, mu_k)),
                               rtol=1e-4, atol=1e-5)

    # masked path (torch.masked_select realized in-kernel via sentinel + count)
    mask = jax.random.uniform(km, (2, 16, 16)) > 0.4
    hist_m = triple_dim_hist(x, mask=mask, K=K, L=L, W=W, mu_k=mu_k)
    hist_m = jax.block_until_ready(hist_m)
    np.testing.assert_allclose(np.asarray(hist_m),
                               np.asarray(_reference(x, mask, K, L, W, mu_k)),
                               rtol=1e-4, atol=1e-5)

    print("KERNEL_OK")
</pallas_src>

<mosaic_0001>
module attributes {stable_mosaic.version = 11 : i64} {
  func.func @_hist_kernel(%arg0: i32, %arg1: i32, %arg2: memref<3x8x8x128xf32, #tpu.memory_space<vmem>>, %arg3: memref<1x16x3x8x128xf32, #tpu.memory_space<vmem>>) attributes {dimension_semantics = [#tpu.dimension_semantics<parallel>, #tpu.dimension_semantics<arbitrary>], iteration_bounds = array<i64: 1, 1>, scalar_prefetch = 0 : i64, scratch_operands = 0 : i64, tpu.core_type = #tpu.core_type<tc>, window_params = [{transform_indices = @transform_0, window_bounds = array<i64: 3, 8, 8, 128>}, {transform_indices = @transform_1, window_bounds = array<i64: 1, 16, 3, 8, 128>}]} {
    %c0_i32 = arith.constant 0 : i32
    %0 = arith.cmpi eq, %arg1, %c0_i32 : i32
    %1 = arith.extui %0 : i1 to i32
    %c0_i32_0 = arith.constant 0 : i32
    %2 = arith.cmpi ne, %1, %c0_i32_0 : i32
    scf.if %2 {
      %cst_343 = arith.constant 0.000000e+00 : f32
      %269 = vector.broadcast %cst_343 : f32 to vector<16x3x8x128xf32>
      %c0_344 = arith.constant 0 : index
      %c0_345 = arith.constant 0 : index
      %c0_346 = arith.constant 0 : index
      %c0_347 = arith.constant 0 : index
      %c0_348 = arith.constant 0 : index
      %270 = vector.load %arg3[%c0_344, %c0_345, %c0_346, %c0_347, %c0_348] : memref<1x16x3x8x128xf32, #tpu.memory_space<vmem>>, vector<1x16x3x8x128xf32>
      %271 = vector.shape_cast %270 : vector<1x16x3x8x128xf32> to vector<16x3x8x128xf32>
      %272 = vector.shape_cast %269 : vector<16x3x8x128xf32> to vector<1x16x3x8x128xf32>
      tpu.vector_store %arg3[%c0_344, %c0_345, %c0_346, %c0_347, %c0_348], %272 {strides = array<i32>} : memref<1x16x3x8x128xf32, #tpu.memory_space<vmem>>, vector<1x16x3x8x128xf32>,
    } else {
    }
    %c0_i32_1 = arith.constant 0 : i32
    %c8_i32 = arith.constant 8 : i32
    %3 = arith.muli %c0_i32_1, %c8_i32 : i32
    %4 = tpu.assume_multiple %3, 8 : i32
    %c0 = arith.constant 0 : index
    %5 = arith.index_cast %4 : i32 to index
    %c0_2 = arith.constant 0 : index
    %c0_3 = arith.constant 0 : index
    %6 = vector.load %arg2[%c0, %5, %c0_2, %c0_3] : memref<3x8x8x128xf32, #tpu.memory_space<vmem>>, vector<3x8x8x128xf32>
    %cst = arith.constant 2.000000e+01 : f32
    %7 = vector.broadcast %cst : f32 to vector<3x8x8x128xf32>
    %8 = arith.mulf %6, %7 : vector<3x8x8x128xf32>
    %cst_4 = arith.constant 0.000000e+00 : f32
    %9 = vector.broadcast %cst_4 : f32 to vector<3x8x8x128xf32>
    %10 = arith.subf %8, %9 : vector<3x8x8x128xf32>
    %11 = math.tanh %10 : vector<3x8x8x128xf32>
    %cst_5 = arith.constant dense<0.000000e+00> : vector<3x8x128xf32>
    %12 = vector.multi_reduction <add>, %11, %cst_5 [1] : vector<3x8x8x128xf32> to vector<3x8x128xf32>
    %c0_6 = arith.constant 0 : index
    %c0_7 = arith.constant 0 : index
    %c0_8 = arith.constant 0 : index
    %c0_9 = arith.constant 0 : index
    %c0_10 = arith.constant 0 : index
    %13 = vector.load %arg3[%c0_6, %c0_7, %c0_8, %c0_9, %c0_10] : memref<1x16x3x8x128xf32, #tpu.memory_space<vmem>>, vector<1x1x3x8x128xf32>
    %14 = vector.shape_cast %13 : vector<1x1x3x8x128xf32> to vector<3x8x128xf32>
    %15 = arith.addf %14, %12 : vector<3x8x128xf32>
    %c0_11 = arith.constant 0 : index
    %c0_12 = arith.constant 0 : index
    %c0_13 = arith.constant 0 : index
    %c0_14 = arith.constant 0 : index
    %c0_15 = arith.constant 0 : index
    %16 = vector.load %arg3[%c0_11, %c0_12, %c0_13, %c0_14, %c0_15] : memref<1x16x3x8x128xf32, #tpu.memory_space<vmem>>, vector<1x1x3x8x128xf32>
    %17 = vector.shape_cast %16 : vector<1x1x3x8x128xf32> to vector<3x8x128xf32>
    %18 = vector.shape_cast %15 : vector<3x8x128xf32> to vector<1x1x3x8x128xf32>
    tpu.vector_store %arg3[%c0_11, %c0_12, %c0_13, %c0_14, %c0_15], %18 {strides = array<i32>} : memref<1x16x3x8x128xf32, #tpu.memory_space<vmem>>, vector<1x1x3x8x128xf32>,
    %cst_16 = arith.constant 1.250000e+00 : f32
    %19 = vector.broadcast %cst_16 : f32 to vector<3x8x8x128xf32>
    %20 = arith.subf %8, %19 : vector<3x8x8x128xf32>
    %21 = math.tanh %20 : vector<3x8x8x128xf32>
    %cst_17 = arith.constant dense<0.000000e+00> : vector<3x8x128xf32>
    %22 = vector.multi_reduction <add>, %21, %cst_17 [1] : vector<3x8x8x128xf32> to vector<3x8x128xf32>
    %c0_18 = arith.constant 0 : index
    %c1 = arith.constant 1 : index
    %c0_19 = arith.constant 0 : index
    %c0_20 = arith.constant 0 : index
    %c0_21 = arith.constant 0 : index
    %23 = vector.load %arg3[%c0_18, %c1, %c0_19, %c0_20, %c0_21] : memref<1x16x3x8x128xf32, #tpu.memory_space<vmem>>, vector<1x1x3x8x128xf32>
    %24 = vector.shape_cast %23 : vector<1x1x3x8x128xf32> to vector<3x8x128xf32>
    %25 = arith.addf %24, %22 : vector<3x8x128xf32>
    %c0_22 = arith.constant 0 : index
    %c1_23 = arith.constant 1 : index
    %c0_24 = arith.constant 0 : index
    %c0_25 = arith.constant 0 : index
    %c0_26 = arith.constant 0 : index
    %26 = vector.load %arg3[%c0_22, %c1_23, %c0_24, %c0_25, %c0_26] : memref<1x16x3x8x128xf32, #tpu.memory_space<vmem>>, vector<1x1x3x8x128xf32>
    %27 = vector.shape_cast %26 : vector<1x1x3x8x128xf32> to vector<3x8x128xf32>
    %28 = vector.shape_cast %25 : vector<3x8x128xf32> to vector<1x1x3x8x128xf32>
    tpu.vector_store %arg3[%c0_22, %c1_23, %c0_24, %c0_25, %c0_26], %28 {strides = array<i32>} : memref<1x16x3x8x128xf32, #tpu.memory_space<vmem>>, vector<1x1x3x8x128xf32>,
    %c0_27 = arith.constant 0 : index
    %c0_28 = arith.constant 0 : index
    %c0_29 = arith.constant 0 : index
    %c0_30 = arith.constant 0 : index
    %c0_31 = arith.constant 0 : index
    %29 = vector.load %arg3[%c0_27, %c0_28, %c0_29, %c0_30, %c0_31] : memref<1x16x3x8x128xf32, #tpu.memory_space<vmem>>, vector<1x1x3x8x128xf32>
    %30 = vector.shape_cast %29 : vector<1x1x3x8x128xf32> to vector<3x8x128xf32>
    %31 = arith.subf %30, %22 : vector<3x8x128xf32>
    %c0_32 = arith.constant 0 : index
    %c0_33 = arith.constant 0 : index
    %c0_34 = arith.constant 0 : index
    %c0_35 = arith.constant 0 : index
    %c0_36 = arith.constant 0 : index
    %32 = vector.load %arg3[%c0_32, %c0_33, %c0_34, %c0_35, %c0_36] : memref<1x16x3x8x128xf32, #tpu.memory_space<vmem>>, vector<1x1x3x8x128xf32>
    %33 = vector.shape_cast %32 : vector<1x1x3x8x128xf32> to vector<3x8x128xf32>
    %34 = vector.shape_cast %31 : vector<3x8x128xf32> to vector<1x1x3x8x128xf32>
    tpu.vector_store %arg3[%c0_32, %c0_33, %c0_34, %c0_35, %c0_36], %34 {strides = array<i32>} : memref<1x16x3x8x128xf32, #tpu.memory_space<vmem>>, vector<1x1x3x8x128xf32>,
    %cst_37 = arith.constant 2.500000e+00 : f32
    %35 = vector.broadcast %cst_37 : f32 to vector<3x8x8x128xf32>
    %36 = arith.subf %8, %35 : vector<3x8x8x128xf32>
    %37 = math.tanh %36 : vector<3x8x8x128xf32>
    %cst_38 = arith.constant dense<0.000000e+00> : vector<3x8x128xf32>
    %38 = vector.multi_reduction <add>, %37, %cst_38 [1] : vector<3x8x8x128xf32> to vector<3x8x128xf32>
    %c0_39 = arith.constant 0 : index
    %c2 = arith.constant 2 : index
    %c0_40 = arith.constant 0 : index
    %c0_41 = arith.constant 0 : index
    %c0_42 = arith.constant 0 : index
    %39 = vector.load %arg3[%c0_39, %c2, %c0_40, %c0_41, %c0_42] : memref<1x16x3x8x128xf32, #tpu.memory_space<vmem>>, vector<1x1x3x8x128xf32>
    %40 = vector.shape_cast %39 : vector<1x1x3x8x128xf32> to vector<3x8x128xf32>
    %41 = arith.addf %40, %38 : vector<3x8x128xf32>
    %c0_43 = arith.constant 0 : index
    %c2_44 = arith.constant 2 : index
    %c0_45 = arith.constant 0 : index
    %c0_46 = arith.constant 0 : index
    %c0_47 = arith.constant 0 : index
    %42 = vector.load %arg3[%c0_43, %c2_44, %c0_45, %c0_46, %c0_47] : memref<1x16x3x8x128xf32, #tpu.memory_space<vmem>>, vector<1x1x3x8x128xf32>
    %43 = vector.shape_cast %42 : vector<1x1x3x8x128xf32> to vector<3x8x128xf32>
    %44 = vector.shape_cast %41 : vector<3x8x128xf32> to vector<1x1x3x8x128xf32>
    tpu.vector_store %arg3[%c0_43, %c2_44, %c0_45, %c0_46, %c0_47], %44 {strides = array<i32>} : memref<1x16x3x8x128xf32, #tpu.memory_space<vmem>>, vector<1x1x3x8x128xf32>,
    %c0_48 = arith.constant 0 : index
    %c1_49 = arith.constant 1 : index
    %c0_50 = arith.constant 0 : index
    %c0_51 = arith.constant 0 : index
    %c0_52 = arith.constant 0 : index
    %45 = vector.load %arg3[%c0_48, %c1_49, %c0_50, %c0_51, %c0_52] : memref<1x16x3x8x128xf32, #tpu.memory_space<vmem>>, vector<1x1x3x8x128xf32>
    %46 = vector.shape_cast %45 : vector<1x1x3x8x128xf32> to vector<3x8x128xf32>
    %47 = arith.subf %46, %38 : vector<3x8x128xf32>
    %c0_53 = arith.constant 0 : index
    %c1_54 = arith.constant 1 : index
    %c0_55 = arith.constant 0 : index
    %c0_56 = arith.constant 0 : index
    %c0_57 = arith.constant 0 : index
    %48 = vector.load %arg3[%c0_53, %c1_54, %c0_55, %c0_56, %c0_57] : memref<1x16x3x8x128xf32, #tpu.memory_space<vmem>>, vector<1x1x3x8x128xf32>
    %49 = vector.shape_cast %48 : vector<1x1x3x8x128xf32> to vector<3x8x128xf32>
    %50 = vector.shape_cast %47 : vector<3x8x128xf32> to vector<1x1x3x8x128xf32>
    tpu.vector_store %arg3[%c0_53, %c1_54, %c0_55, %c0_56, %c0_57], %50 {strides = array<i32>} : memref<1x16x3x8x128xf32, #tpu.memory_space<vmem>>, vector<1x1x3x8x128xf32>,
    %cst_58 = arith.constant 3.750000e+00 : f32
    %51 = vector.broadcast %cst_58 : f32 to vector<3x8x8x128xf32>
    %52 = arith.subf %8, %51 : vector<3x8x8x128xf32>
    %53 = math.tanh %52 : vector<3x8x8x128xf32>
    %cst_59 = arith.constant dense<0.000000e+00> : vector<3x8x128xf32>
    %54 = vector.multi_reduction <add>, %53, %cst_59 [1] : vector<3x8x8x128xf32> to vector<3x8x128xf32>
    %c0_60 = arith.constant 0 : index
    %c3 = arith.constant 3 : index
    %c0_61 = arith.constant 0 : index
    %c0_62 = arith.constant 0 : index
    %c0_63 = arith.constant 0 : index
    %55 = vector.load %arg3[%c0_60, %c3, %c0_61, %c0_62, %c0_63] : memref<1x16x3x8x128xf32, #tpu.memory_space<vmem>>, vector<1x1x3x8x128xf32>
    %56 = vector.shape_cast %55 : vector<1x1x3x8x128xf32> to vector<3x8x128xf32>
    %57 = arith.addf %56, %54 : vector<3x8x128xf32>
    %c0_64 = arith.constant 0 : index
    %c3_65 = arith.constant 3 : index
    %c0_66 = arith.constant 0 : index
    %c0_67 = arith.constant 0 : index
    %c0_68 = arith.constant 0 : index
    %58 = vector.load %arg3[%c0_64, %c3_65, %c0_66, %c0_67, %c0_68] : memref<1x16x3x8x128xf32, #tpu.memory_space<vmem>>, vector<1x1x3x8x128xf32>
    %59 = vector.shape_cast %58 : vector<1x1x3x8x128xf32> to vector<3x8x128xf32>
    %60 = vector.shape_cast %57 : vector<3x8x128xf32> to vector<1x1x3x8x128xf32>
    tpu.vector_store %arg3[%c0_64, %c3_65, %c0_66, %c0_67, %c0_68], %60 {strides = array<i32>} : memref<1x16x3x8x128xf32, #tpu.memory_space<vmem>>, vector<1x1x3x8x128xf32>,
    %c0_69 = arith.constant 0 : index
    %c2_70 = arith.constant 2 : index
    %c0_71 = arith.constant 0 : index
    %c0_72 = arith.constant 0 : index
    %c0_73 = arith.constant 0 : index
    %61 = vector.load %arg3[%c0_69, %c2_70, %c0_71, %c0_72, %c0_73] : memref<1x16x3x8x128xf32, #tpu.memory_space<vmem>>, vector<1x1x3x8x128xf32>
    %62 = vector.shape_cast %61 : vector<1x1x3x8x128xf32> to vector<3x8x128xf32>
    %63 = arith.subf %62, %54 : vector<3x8x128xf32>
    %c0_74 = arith.constant 0 : index
    %c2_75 = arith.constant 2 : index
    %c0_76 = arith.constant 0 : index
    %c0_77 = arith.constant 0 : index
    %c0_78 = arith.constant 0 : index
    %64 = vector.load %arg3[%c0_74, %c2_75, %c0_76, %c0_77, %c0_78] : memref<1x16x3x8x128xf32, #tpu.memory_space<vmem>>, vector<1x1x3x8x128xf32>
    %65 = vector.shape_cast %64 : vector<1x1x3x8x128xf32> to vector<3x8x128xf32>
    %66 = vector.shape_cast %63 : vector<3x8x128xf32> to vector<1x1x3x8x128xf32>
    tpu.vector_store %arg3[%c0_74, %c2_75, %c0_76, %c0_77, %c0_78], %66 {strides = array<i32>} : memref<1x16x3x8x128xf32, #tpu.memory_space<vmem>>, vector<1x1x3x8x128xf32>,
    %cst_79 = arith.constant 5.000000e+00 : f32
    %67 = vector.broadcast %cst_79 : f32 to vector<3x8x8x128xf32>
    %68 = arith.subf %8, %67 : vector<3x8x8x128xf32>
    %69 = math.tanh %68 : vector<3x8x8x128xf32>
    %cst_80 = arith.constant dense<0.000000e+00> : vector<3x8x128xf32>
    %70 = vector.multi_reduction <add>, %69, %cst_80 [1] : vector<3x8x8x128xf32> to vector<3x8x128xf32>
    %c0_81 = arith.constant 0 : index
    %c4 = arith.constant 4 : index
    %c0_82 = arith.constant 0 : index
    %c0_83 = arith.constant 0 : index
    %c0_84 = arith.constant 0 : index
    %71 = vector.load %arg3[%c0_81, %c4, %c0_82, %c0_83, %c0_84] : memref<1x16x3x8x128xf32, #tpu.memory_space<vmem>>, vector<1x1x3x8x128xf32>
    %72 = vector.shape_cast %71 : vector<1x1x3x8x128xf32> to vector<3x8x128xf32>
    %73 = arith.addf %72, %70 : vector<3x8x128xf32>
    %c0_85 = arith.constant 0 : index
    %c4_86 = arith.constant 4 : index
    %c0_87 = arith.constant 0 : index
    %c0_88 = arith.constant 0 : index
    %c0_89 = arith.constant 0 : index
    %74 = vector.load %arg3[%c0_85, %c4_86, %c0_87, %c0_88, %c0_89] : memref<1x16x3x8x128xf32, #tpu.memory_space<vmem>>, vector<1x1x3x8x128xf32>
    %75 = vector.shape_cast %74 : vector<1x1x3x8x128xf32> to vector<3x8x128xf32>
    %76 = vector.shape_cast %73 : vector<3x8x128xf32> to vector<1x1x3x8x128xf32>
    tpu.vector_store %arg3[%c0_85, %c4_86, %c0_87, %c0_88, %c0_89], %76 {strides = array<i32>} : memref<1x16x3x8x128xf32, #tpu.memory_space<vmem>>, vector<1x1x3x8x128xf32>,
    %c0_90 = arith.constant 0 : index
    %c3_91 = arith.constant 3 : index
    %c0_92 = arith.constant 0 : index
    %c0_93 = arith.constant 0 : index
    %c0_94 = arith.constant 0 : index
    %77 = vector.load %arg3[%c0_90, %c3_91, %c0_92, %c0_93, %c0_94] : memref<1x16x3x8x128xf32, #tpu.memory_space<vmem>>, vector<1x1x3x8x128xf32>
    %78 = vector.shape_cast %77 : vector<1x1x3x8x128xf32> to vector<3x8x128xf32>
    %79 = arith.subf %78, %70 : vector<3x8x128xf32>
    %c0_95 = arith.constant 0 : index
    %c3_96 = arith.constant 3 : index
    %c0_97 = arith.constant 0 : index
    %c0_98 = arith.constant 0 : index
    %c0_99 = arith.constant 0 : index
    %80 = vector.load %arg3[%c0_95, %c3_96, %c0_97, %c0_98, %c0_99] : memref<1x16x3x8x128xf32, #tpu.memory_space<vmem>>, vector<1x1x3x8x128xf32>
    %81 = vector.shape_cast %80 : vector<1x1x3x8x128xf32> to vector<3x8x128xf32>
    %82 = vector.shape_cast %79 : vector<3x8x128xf32> to vector<1x1x3x8x128xf32>
    tpu.vector_store %arg3[%c0_95, %c3_96, %c0_97, %c0_98, %c0_99], %82 {strides = array<i32>} : memref<1x16x3x8x128xf32, #tpu.memory_space<vmem>>, vector<1x1x3x8x128xf32>,
    %cst_100 = arith.constant 6.250000e+00 : f32
    %83 = vector.broadcast %cst_100 : f32 to vector<3x8x8x128xf32>
    %84 = arith.subf %8, %83 : vector<3x8x8x128xf32>
    %85 = math.tanh %84 : vector<3x8x8x128xf32>
    %cst_101 = arith.constant dense<0.000000e+00> : vector<3x8x128xf32>
    %86 = vector.multi_reduction <add>, %85, %cst_101 [1] : vector<3x8x8x128xf32> to vector<3x8x128xf32>
    %c0_102 = arith.constant 0 : index
    %c5 = arith.constant 5 : index
    %c0_103 = arith.constant 0 : index
    %c0_104 = arith.constant 0 : index
    %c0_105 = arith.constant 0 : index
    %87 = vector.load %arg3[%c0_102, %c5, %c0_103, %c0_104, %c0_105] : memref<1x16x3x8x128xf32, #tpu.memory_space<vmem>>, vector<1x1x3x8x128xf32>
    %88 = vector.shape_cast %87 : vector<1x1x3x8x128xf32> to vector<3x8x128xf32>
    %89 = arith.addf %88, %86 : vector<3x8x128xf32>
    %c0_106 = arith.constant 0 : index
    %c5_107 = arith.constant 5 : index
    %c0_108 = arith.constant 0 : index
    %c0_109 = arith.constant 0 : index
    %c0_110 = arith.constant 0 : index
    %90 = vector.load %arg3[%c0_106, %c5_107, %c0_108, %c0_109, %c0_110] : memref<1x16x3x8x128xf32, #tpu.memory_space<vmem>>, vector<1x1x3x8x128xf32>
    %91 = vector.shape_cast %90 : vector<1x1x3x8x128xf32> to vector<3x8x128xf32>
    %92 = vector.shape_cast %89 : vector<3x8x128xf32> to vector<1x1x3x8x128xf32>
    tpu.vector_store %arg3[%c0_106, %c5_107, %c0_108, %c0_109, %c0_110], %92 {strides = array<i32>} : memref<1x16x3x8x128xf32, #tpu.memory_space<vmem>>, vector<1x1x3x8x128xf32>,
    %c0_111 = arith.constant 0 : index
    %c4_112 = arith.constant 4 : index
    %c0_113 = arith.constant 0 : index
    %c0_114 = arith.constant 0 : index
    %c0_115 = arith.constant 0 : index
    %93 = vector.load %arg3[%c0_111, %c4_112, %c0_113, %c0_114, %c0_115] : memref<1x16x3x8x128xf32, #tpu.memory_space<vmem>>, vector<1x1x3x8x128xf32>
    %94 = vector.shape_cast %93 : vector<1x1x3x8x128xf32> to vector<3x8x128xf32>
    %95 = arith.subf %94, %86 : vector<3x8x128xf32>
    %c0_116 = arith.constant 0 : index
    %c4_117 = arith.constant 4 : index
    %c0_118 = arith.constant 0 : index
    %c0_119 = arith.constant 0 : index
    %c0_120 = arith.constant 0 : index
    %96 = vector.load %arg3[%c0_116, %c4_117, %c0_118, %c0_119, %c0_120] : memref<1x16x3x8x128xf32, #tpu.memory_space<vmem>>, vector<1x1x3x8x128xf32>
    %97 = vector.shape_cast %96 : vector<1x1x3x8x128xf32> to vector<3x8x128xf32>
    %98 = vector.shape_cast %95 : vector<3x8x128xf32> to vector<1x1x3x8x128xf32>
    tpu.vector_store %arg3[%c0_116, %c4_117, %c0_118, %c0_119, %c0_120], %98 {strides = array<i32>} : memref<1x16x3x8x128xf32, #tpu.memory_space<vmem>>, vector<1x1x3x8x128xf32>,
    %cst_121 = arith.constant 7.500000e+00 : f32
    %99 = vector.broadcast %cst_121 : f32 to vector<3x8x8x128xf32>
    %100 = arith.subf %8, %99 : vector<3x8x8x128xf32>
    %101 = math.tanh %100 : vector<3x8x8x128xf32>
    %cst_122 = arith.constant dense<0.000000e+00> : vector<3x8x128xf32>
    %102 = vector.multi_reduction <add>, %101, %cst_122 [1] : vector<3x8x8x128xf32> to vector<3x8x128xf32>
    %c0_123 = arith.constant 0 : index
    %c6 = arith.constant 6 : index
    %c0_124 = arith.constant 0 : index
    %c0_125 = arith.constant 0 : index
    %c0_126 = arith.constant 0 : index
    %103 = vector.load %arg3[%c0_123, %c6, %c0_124, %c0_125, %c0_126] : memref<1x16x3x8x128xf32, #tpu.memory_space<vmem>>, vector<1x1x3x8x128xf32>
    %104 = vector.shape_cast %103 : vector<1x1x3x8x128xf32> to vector<3x8x128xf32>
    %105 = arith.addf %104, %102 : vector<3x8x128xf32>
    %c0_127 = arith.constant 0 : index
    %c6_128 = arith.constant 6 : index
    %c0_129 = arith.constant 0 : index
    %c0_130 = arith.constant 0 : index
    %c0_131 = arith.constant 0 : index
    %106 = vector.load %arg3[%c0_127, %c6_128, %c0_129, %c0_130, %c0_131] : memref<1x16x3x8x128xf32, #tpu.memory_space<vmem>>, vector<1x1x3x8x128xf32>
    %107 = vector.shape_cast %106 : vector<1x1x3x8x128xf32> to vector<3x8x128xf32>
    %108 = vector.shape_cast %105 : vector<3x8x128xf32> to vector<1x1x3x8x128xf32>
    tpu.vector_store %arg3[%c0_127, %c6_128, %c0_129, %c0_130, %c0_131], %108 {strides = array<i32>} : memref<1x16x3x8x128xf32, #tpu.memory_space<vmem>>, vector<1x1x3x8x128xf32>,
    %c0_132 = arith.constant 0 : index
    %c5_133 = arith.constant 5 : index
    %c0_134 = arith.constant 0 : index
    %c0_135 = arith.constant 0 : index
    %c0_136 = arith.constant 0 : index
    %109 = vector.load %arg3[%c0_132, %c5_133, %c0_134, %c0_135, %c0_136] : memref<1x16x3x8x128xf32, #tpu.memory_space<vmem>>, vector<1x1x3x8x128xf32>
    %110 = vector.shape_cast %109 : vector<1x1x3x8x128xf32> to vector<3x8x128xf32>
    %111 = arith.subf %110, %102 : vector<3x8x128xf32>
    %c0_137 = arith.constant 0 : index
    %c5_138 = arith.constant 5 : index
    %c0_139 = arith.constant 0 : index
    %c0_140 = arith.constant 0 : index
    %c0_141 = arith.constant 0 : index
    %112 = vector.load %arg3[%c0_137, %c5_138, %c0_139, %c0_140, %c0_141] : memref<1x16x3x8x128xf32, #tpu.memory_space<vmem>>, vector<1x1x3x8x128xf32>
    %113 = vector.shape_cast %112 : vector<1x1x3x8x128xf32> to vector<3x8x128xf32>
    %114 = vector.shape_cast %111 : vector<3x8x128xf32> to vector<1x1x3x8x128xf32>
    tpu.vector_store %arg3[%c0_137, %c5_138, %c0_139, %c0_140, %c0_141], %114 {strides = array<i32>} : memref<1x16x3x8x128xf32, #tpu.memory_space<vmem>>, vector<1x1x3x8x128xf32>,
    %cst_142 = arith.constant 8.750000e+00 : f32
    %115 = vector.broadcast %cst_142 : f32 to vector<3x8x8x128xf32>
    %116 = arith.subf %8, %115 : vector<3x8x8x128xf32>
    %117 = math.tanh %116 : vector<3x8x8x128xf32>
    %cst_143 = arith.constant dense<0.000000e+00> : vector<3x8x128xf32>
    %118 = vector.multi_reduction <add>, %117, %cst_143 [1] : vector<3x8x8x128xf32> to vector<3x8x128xf32>
    %c0_144 = arith.constant 0 : index
    %c7 = arith.constant 7 : index
    %c0_145 = arith.constant 0 : index
    %c0_146 = arith.constant 0 : index
    %c0_147 = arith.constant 0 : index
    %119 = vector.load %arg3[%c0_144, %c7, %c0_145, %c0_146, %c0_147] : memref<1x16x3x8x128xf32, #tpu.memory_space<vmem>>, vector<1x1x3x8x128xf32>
    %120 = vector.shape_cast %119 : vector<1x1x3x8x128xf32> to vector<3x8x128xf32>
    %121 = arith.addf %120, %118 : vector<3x8x128xf32>
    %c0_148 = arith.constant 0 : index
    %c7_149 = arith.constant 7 : index
    %c0_150 = arith.constant 0 : index
    %c0_151 = arith.constant 0 : index
    %c0_152 = arith.constant 0 : index
    %122 = vector.load %arg3[%c0_148, %c7_149, %c0_150, %c0_151, %c0_152] : memref<1x16x3x8x128xf32, #tpu.memory_space<vmem>>, vector<1x1x3x8x128xf32>
    %123 = vector.shape_cast %122 : vector<1x1x3x8x128xf32> to vector<3x8x128xf32>
    %124 = vector.shape_cast %121 : vector<3x8x128xf32> to vector<1x1x3x8x128xf32>
    tpu.vector_store %arg3[%c0_148, %c7_149, %c0_150, %c0_151, %c0_152], %124 {strides = array<i32>} : memref<1x16x3x8x128xf32, #tpu.memory_space<vmem>>, vector<1x1x3x8x128xf32>,
    %c0_153 = arith.constant 0 : index
    %c6_154 = arith.constant 6 : index
    %c0_155 = arith.constant 0 : index
    %c0_156 = arith.constant 0 : index
    %c0_157 = arith.constant 0 : index
    %125 = vector.load %arg3[%c0_153, %c6_154, %c0_155, %c0_156, %c0_157] : memref<1x16x3x8x128xf32, #tpu.memory_space<vmem>>, vector<1x1x3x8x128xf32>
    %126 = vector.shape_cast %125 : vector<1x1x3x8x128xf32> to vector<3x8x128xf32>
    %127 = arith.subf %126, %118 : vector<3x8x128xf32>
    %c0_158 = arith.constant 0 : index
    %c6_159 = arith.constant 6 : index
    %c0_160 = arith.constant 0 : index
    %c0_161 = arith.constant 0 : index
    %c0_162 = arith.constant 0 : index
    %128 = vector.load %arg3[%c0_158, %c6_159, %c0_160, %c0_161, %c0_162] : memref<1x16x3x8x128xf32, #tpu.memory_space<vmem>>, vector<1x1x3x8x128xf32>
    %129 = vector.shape_cast %128 : vector<1x1x3x8x128xf32> to vector<3x8x128xf32>
    %130 = vector.shape_cast %127 : vector<3x8x128xf32> to vector<1x1x3x8x128xf32>
    tpu.vector_store %arg3[%c0_158, %c6_159, %c0_160, %c0_161, %c0_162], %130 {strides = array<i32>} : memref<1x16x3x8x128xf32, #tpu.memory_space<vmem>>, vector<1x1x3x8x128xf32>,
    %cst_163 = arith.constant 1.000000e+01 : f32
    %131 = vector.broadcast %cst_163 : f32 to vector<3x8x8x128xf32>
    %132 = arith.subf %8, %131 : vector<3x8x8x128xf32>
    %133 = math.tanh %132 : vector<3x8x8x128xf32>
    %cst_164 = arith.constant dense<0.000000e+00> : vector<3x8x128xf32>
    %134 = vector.multi_reduction <add>, %133, %cst_164 [1] : vector<3x8x8x128xf32> to vector<3x8x128xf32>
    %c0_165 = arith.constant 0 : index
    %c8 = arith.constant 8 : index
    %c0_166 = arith.constant 0 : index
    %c0_167 = arith.constant 0 : index
    %c0_168 = arith.constant 0 : index
    %135 = vector.load %arg3[%c0_165, %c8, %c0_166, %c0_167, %c0_168] : memref<1x16x3x8x128xf32, #tpu.memory_space<vmem>>, vector<1x1x3x8x128xf32>
    %136 = vector.shape_cast %135 : vector<1x1x3x8x128xf32> to vector<3x8x128xf32>
    %137 = arith.addf %136, %134 : vector<3x8x128xf32>
    %c0_169 = arith.constant 0 : index
    %c8_170 = arith.constant 8 : index
    %c0_171 = arith.constant 0 : index
    %c0_172 = arith.constant 0 : index
    %c0_173 = arith.constant 0 : index
    %138 = vector.load %arg3[%c0_169, %c8_170, %c0_171, %c0_172, %c0_173] : memref<1x16x3x8x128xf32, #tpu.memory_space<vmem>>, vector<1x1x3x8x128xf32>
    %139 = vector.shape_cast %138 : vector<1x1x3x8x128xf32> to vector<3x8x128xf32>
    %140 = vector.shape_cast %137 : vector<3x8x128xf32> to vector<1x1x3x8x128xf32>
    tpu.vector_store %arg3[%c0_169, %c8_170, %c0_171, %c0_172, %c0_173], %140 {strides = array<i32>} : memref<1x16x3x8x128xf32, #tpu.memory_space<vmem>>, vector<1x1x3x8x128xf32>,
    %c0_174 = arith.constant 0 : index
    %c7_175 = arith.constant 7 : index
    %c0_176 = arith.constant 0 : index
    %c0_177 = arith.constant 0 : index
    %c0_178 = arith.constant 0 : index
    %141 = vector.load %arg3[%c0_174, %c7_175, %c0_176, %c0_177, %c0_178] : memref<1x16x3x8x128xf32, #tpu.memory_space<vmem>>, vector<1x1x3x8x128xf32>
    %142 = vector.shape_cast %141 : vector<1x1x3x8x128xf32> to vector<3x8x128xf32>
    %143 = arith.subf %142, %134 : vector<3x8x128xf32>
    %c0_179 = arith.constant 0 : index
    %c7_180 = arith.constant 7 : index
    %c0_181 = arith.constant 0 : index
    %c0_182 = arith.constant 0 : index
    %c0_183 = arith.constant 0 : index
    %144 = vector.load %arg3[%c0_179, %c7_180, %c0_181, %c0_182, %c0_183] : memref<1x16x3x8x128xf32, #tpu.memory_space<vmem>>, vector<1x1x3x8x128xf32>
    %145 = vector.shape_cast %144 : vector<1x1x3x8x128xf32> to vector<3x8x128xf32>
    %146 = vector.shape_cast %143 : vector<3x8x128xf32> to vector<1x1x3x8x128xf32>
    tpu.vector_store %arg3[%c0_179, %c7_180, %c0_181, %c0_182, %c0_183], %146 {strides = array<i32>} : memref<1x16x3x8x128xf32, #tpu.memory_space<vmem>>, vector<1x1x3x8x128xf32>,
    %cst_184 = arith.constant 1.125000e+01 : f32
    %147 = vector.broadcast %cst_184 : f32 to vector<3x8x8x128xf32>
    %148 = arith.subf %8, %147 : vector<3x8x8x128xf32>
    %149 = math.tanh %148 : vector<3x8x8x128xf32>
    %cst_185 = arith.constant dense<0.000000e+00> : vector<3x8x128xf32>
    %150 = vector.multi_reduction <add>, %149, %cst_185 [1] : vector<3x8x8x128xf32> to vector<3x8x128xf32>
    %c0_186 = arith.constant 0 : index
    %c9 = arith.constant 9 : index
    %c0_187 = arith.constant 0 : index
    %c0_188 = arith.constant 0 : index
    %c0_189 = arith.constant 0 : index
    %151 = vector.load %arg3[%c0_186, %c9, %c0_187, %c0_188, %c0_189] : memref<1x16x3x8x128xf32, #tpu.memory_space<vmem>>, vector<1x1x3x8x128xf32>
    %152 = vector.shape_cast %151 : vector<1x1x3x8x128xf32> to vector<3x8x128xf32>
    %153 = arith.addf %152, %150 : vector<3x8x128xf32>
    %c0_190 = arith.constant 0 : index
    %c9_191 = arith.constant 9 : index
    %c0_192 = arith.constant 0 : index
    %c0_193 = arith.constant 0 : index
    %c0_194 = arith.constant 0 : index
    %154 = vector.load %arg3[%c0_190, %c9_191, %c0_192, %c0_193, %c0_194] : memref<1x16x3x8x128xf32, #tpu.memory_space<vmem>>, vector<1x1x3x8x128xf32>
    %155 = vector.shape_cast %154 : vector<1x1x3x8x128xf32> to vector<3x8x128xf32>
    %156 = vector.shape_cast %153 : vector<3x8x128xf32> to vector<1x1x3x8x128xf32>
    tpu.vector_store %arg3[%c0_190, %c9_191, %c0_192, %c0_193, %c0_194], %156 {strides = array<i32>} : memref<1x16x3x8x128xf32, #tpu.memory_space<vmem>>, vector<1x1x3x8x128xf32>,
    %c0_195 = arith.constant 0 : index
    %c8_196 = arith.constant 8 : index
    %c0_197 = arith.constant 0 : index
    %c0_198 = arith.constant 0 : index
    %c0_199 = arith.constant 0 : index
    %157 = vector.load %arg3[%c0_195, %c8_196, %c0_197, %c0_198, %c0_199] : memref<1x16x3x8x128xf32, #tpu.memory_space<vmem>>, vector<1x1x3x8x128xf32>
    %158 = vector.shape_cast %157 : vector<1x1x3x8x128xf32> to vector<3x8x128xf32>
    %159 = arith.subf %158, %150 : vector<3x8x128xf32>
    %c0_200 = arith.constant 0 : index
    %c8_201 = arith.constant 8 : index
    %c0_202 = arith.constant 0 : index
    %c0_203 = arith.constant 0 : index
    %c0_204 = arith.constant 0 : index
    %160 = vector.load %arg3[%c0_200, %c8_201, %c0_202, %c0_203, %c0_204] : memref<1x16x3x8x128xf32, #tpu.memory_space<vmem>>, vector<1x1x3x8x128xf32>
    %161 = vector.shape_cast %160 : vector<1x1x3x8x128xf32> to vector<3x8x128xf32>
    %162 = vector.shape_cast %159 : vector<3x8x128xf32> to vector<1x1x3x8x128xf32>
    tpu.vector_store %arg3[%c0_200, %c8_201, %c0_202, %c0_203, %c0_204], %162 {strides = array<i32>} : memref<1x16x3x8x128xf32, #tpu.memory_space<vmem>>, vector<1x1x3x8x128xf32>,
    %cst_205 = arith.constant 1.250000e+01 : f32
    %163 = vector.broadcast %cst_205 : f32 to vector<3x8x8x128xf32>
    %164 = arith.subf %8, %163 : vector<3x8x8x128xf32>
    %165 = math.tanh %164 : vector<3x8x8x128xf32>
    %cst_206 = arith.constant dense<0.000000e+00> : vector<3x8x128xf32>
    %166 = vector.multi_reduction <add>, %165, %cst_206 [1] : vector<3x8x8x128xf32> to vector<3x8x128xf32>
    %c0_207 = arith.constant 0 : index
    %c10 = arith.constant 10 : index
    %c0_208 = arith.constant 0 : index
    %c0_209 = arith.constant 0 : index
    %c0_210 = arith.constant 0 : index
    %167 = vector.load %arg3[%c0_207, %c10, %c0_208, %c0_209, %c0_210] : memref<1x16x3x8x128xf32, #tpu.memory_space<vmem>>, vector<1x1x3x8x128xf32>
    %168 = vector.shape_cast %167 : vector<1x1x3x8x128xf32> to vector<3x8x128xf32>
    %169 = arith.addf %168, %166 : vector<3x8x128xf32>
    %c0_211 = arith.constant 0 : index
    %c10_212 = arith.constant 10 : index
    %c0_213 = arith.constant 0 : index
    %c0_214 = arith.constant 0 : index
    %c0_215 = arith.constant 0 : index
    %170 = vector.load %arg3[%c0_211, %c10_212, %c0_213, %c0_214, %c0_215] : memref<1x16x3x8x128xf32, #tpu.memory_space<vmem>>, vector<1x1x3x8x128xf32>
    %171 = vector.shape_cast %170 : vector<1x1x3x8x128xf32> to vector<3x8x128xf32>
    %172 = vector.shape_cast %169 : vector<3x8x128xf32> to vector<1x1x3x8x128xf32>
    tpu.vector_store %arg3[%c0_211, %c10_212, %c0_213, %c0_214, %c0_215], %172 {strides = array<i32>} : memref<1x16x3x8x128xf32, #tpu.memory_space<vmem>>, vector<1x1x3x8x128xf32>,
    %c0_216 = arith.constant 0 : index
    %c9_217 = arith.constant 9 : index
    %c0_218 = arith.constant 0 : index
    %c0_219 = arith.constant 0 : index
    %c0_220 = arith.constant 0 : index
    %173 = vector.load %arg3[%c0_216, %c9_217, %c0_218, %c0_219, %c0_220] : memref<1x16x3x8x128xf32, #tpu.memory_space<vmem>>, vector<1x1x3x8x128xf32>
    %174 = vector.shape_cast %173 : vector<1x1x3x8x128xf32> to vector<3x8x128xf32>
    %175 = arith.subf %174, %166 : vector<3x8x128xf32>
    %c0_221 = arith.constant 0 : index
    %c9_222 = arith.constant 9 : index
    %c0_223 = arith.constant 0 : index
    %c0_224 = arith.constant 0 : index
    %c0_225 = arith.constant 0 : index
    %176 = vector.load %arg3[%c0_221, %c9_222, %c0_223, %c0_224, %c0_225] : memref<1x16x3x8x128xf32, #tpu.memory_space<vmem>>, vector<1x1x3x8x128xf32>
    %177 = vector.shape_cast %176 : vector<1x1x3x8x128xf32> to vector<3x8x128xf32>
    %178 = vector.shape_cast %175 : vector<3x8x128xf32> to vector<1x1x3x8x128xf32>
    tpu.vector_store %arg3[%c0_221, %c9_222, %c0_223, %c0_224, %c0_225], %178 {strides = array<i32>} : memref<1x16x3x8x128xf32, #tpu.memory_space<vmem>>, vector<1x1x3x8x128xf32>,
    %cst_226 = arith.constant 1.375000e+01 : f32
    %179 = vector.broadcast %cst_226 : f32 to vector<3x8x8x128xf32>
    %180 = arith.subf %8, %179 : vector<3x8x8x128xf32>
    %181 = math.tanh %180 : vector<3x8x8x128xf32>
    %cst_227 = arith.constant dense<0.000000e+00> : vector<3x8x128xf32>
    %182 = vector.multi_reduction <add>, %181, %cst_227 [1] : vector<3x8x8x128xf32> to vector<3x8x128xf32>
    %c0_228 = arith.constant 0 : index
    %c11 = arith.constant 11 : index
    %c0_229 = arith.constant 0 : index
    %c0_230 = arith.constant 0 : index
    %c0_231 = arith.constant 0 : index
    %183 = vector.load %arg3[%c0_228, %c11, %c0_229, %c0_230, %c0_231] : memref<1x16x3x8x128xf32, #tpu.memory_space<vmem>>, vector<1x1x3x8x128xf32>
    %184 = vector.shape_cast %183 : vector<1x1x3x8x128xf32> to vector<3x8x128xf32>
    %185 = arith.addf %184, %182 : vector<3x8x128xf32>
    %c0_232 = arith.constant 0 : index
    %c11_233 = arith.constant 11 : index
    %c0_234 = arith.constant 0 : index
    %c0_235 = arith.constant 0 : index
    %c0_236 = arith.constant 0 : index
    %186 = vector.load %arg3[%c0_232, %c11_233, %c0_234, %c0_235, %c0_236] : memref<1x16x3x8x128xf32, #tpu.memory_space<vmem>>, vector<1x1x3x8x128xf32>
    %187 = vector.shape_cast %186 : vector<1x1x3x8x128xf32> to vector<3x8x128xf32>
    %188 = vector.shape_cast %185 : vector<3x8x128xf32> to vector<1x1x3x8x128xf32>
    tpu.vector_store %arg3[%c0_232, %c11_233, %c0_234, %c0_235, %c0_236], %188 {strides = array<i32>} : memref<1x16x3x8x128xf32, #tpu.memory_space<vmem>>, vector<1x1x3x8x128xf32>,
    %c0_237 = arith.constant 0 : index
    %c10_238 = arith.constant 10 : index
    %c0_239 = arith.constant 0 : index
    %c0_240 = arith.constant 0 : index
    %c0_241 = arith.constant 0 : index
    %189 = vector.load %arg3[%c0_237, %c10_238, %c0_239, %c0_240, %c0_241] : memref<1x16x3x8x128xf32, #tpu.memory_space<vmem>>, vector<1x1x3x8x128xf32>
    %190 = vector.shape_cast %189 : vector<1x1x3x8x128xf32> to vector<3x8x128xf32>
    %191 = arith.subf %190, %182 : vector<3x8x128xf32>
    %c0_242 = arith.constant 0 : index
    %c10_243 = arith.constant 10 : index
    %c0_244 = arith.constant 0 : index
    %c0_245 = arith.constant 0 : index
    %c0_246 = arith.constant 0 : index
    %192 = vector.load %arg3[%c0_242, %c10_243, %c0_244, %c0_245, %c0_246] : memref<1x16x3x8x128xf32, #tpu.memory_space<vmem>>, vector<1x1x3x8x128xf32>
    %193 = vector.shape_cast %192 : vector<1x1x3x8x128xf32> to vector<3x8x128xf32>
    %194 = vector.shape_cast %191 : vector<3x8x128xf32> to vector<1x1x3x8x128xf32>
    tpu.vector_store %arg3[%c0_242, %c10_243, %c0_244, %c0_245, %c0_246], %194 {strides = array<i32>} : memref<1x16x3x8x128xf32, #tpu.memory_space<vmem>>, vector<1x1x3x8x128xf32>,
    %cst_247 = arith.constant 1.500000e+01 : f32
    %195 = vector.broadcast %cst_247 : f32 to vector<3x8x8x128xf32>
    %196 = arith.subf %8, %195 : vector<3x8x8x128xf32>
    %197 = math.tanh %196 : vector<3x8x8x128xf32>
    %cst_248 = arith.constant dense<0.000000e+00> : vector<3x8x128xf32>
    %198 = vector.multi_reduction <add>, %197, %cst_248 [1] : vector<3x8x8x128xf32> to vector<3x8x128xf32>
    %c0_249 = arith.constant 0 : index
    %c12 = arith.constant 12 : index
    %c0_250 = arith.constant 0 : index
    %c0_251 = arith.constant 0 : index
    %c0_252 = arith.constant 0 : index
    %199 = vector.load %arg3[%c0_249, %c12, %c0_250, %c0_251, %c0_252] : memref<1x16x3x8x128xf32, #tpu.memory_space<vmem>>, vector<1x1x3x8x128xf32>
    %200 = vector.shape_cast %199 : vector<1x1x3x8x128xf32> to vector<3x8x128xf32>
    %201 = arith.addf %200, %198 : vector<3x8x128xf32>
    %c0_253 = arith.constant 0 : index
    %c12_254 = arith.constant 12 : index
    %c0_255 = arith.constant 0 : index
    %c0_256 = arith.constant 0 : index
    %c0_257 = arith.constant 0 : index
    %202 = vector.load %arg3[%c0_253, %c12_254, %c0_255, %c0_256, %c0_257] : memref<1x16x3x8x128xf32, #tpu.memory_space<vmem>>, vector<1x1x3x8x128xf32>
    %203 = vector.shape_cast %202 : vector<1x1x3x8x128xf32> to vector<3x8x128xf32>
    %204 = vector.shape_cast %201 : vector<3x8x128xf32> to vector<1x1x3x8x128xf32>
    tpu.vector_store %arg3[%c0_253, %c12_254, %c0_255, %c0_256, %c0_257], %204 {strides = array<i32>} : memref<1x16x3x8x128xf32, #tpu.memory_space<vmem>>, vector<1x1x3x8x128xf32>,
    %c0_258 = arith.constant 0 : index
    %c11_259 = arith.constant 11 : index
    %c0_260 = arith.constant 0 : index
    %c0_261 = arith.constant 0 : index
    %c0_262 = arith.constant 0 : index
    %205 = vector.load %arg3[%c0_258, %c11_259, %c0_260, %c0_261, %c0_262] : memref<1x16x3x8x128xf32, #tpu.memory_space<vmem>>, vector<1x1x3x8x128xf32>
    %206 = vector.shape_cast %205 : vector<1x1x3x8x128xf32> to vector<3x8x128xf32>
    %207 = arith.subf %206, %198 : vector<3x8x128xf32>
    %c0_263 = arith.constant 0 : index
    %c11_264 = arith.constant 11 : index
    %c0_265 = arith.constant 0 : index
    %c0_266 = arith.constant 0 : index
    %c0_267 = arith.constant 0 : index
    %208 = vector.load %arg3[%c0_263, %c11_264, %c0_265, %c0_266, %c0_267] : memref<1x16x3x8x128xf32, #tpu.memory_space<vmem>>, vector<1x1x3x8x128xf32>
    %209 = vector.shape_cast %208 : vector<1x1x3x8x128xf32> to vector<3x8x128xf32>
    %210 = vector.shape_cast %207 : vector<3x8x128xf32> to vector<1x1x3x8x128xf32>
    tpu.vector_store %arg3[%c0_263, %c11_264, %c0_265, %c0_266, %c0_267], %210 {strides = array<i32>} : memref<1x16x3x8x128xf32, #tpu.memory_space<vmem>>, vector<1x1x3x8x128xf32>,
    %cst_268 = arith.constant 1.625000e+01 : f32
    %211 = vector.broadcast %cst_268 : f32 to vector<3x8x8x128xf32>
    %212 = arith.subf %8, %211 : vector<3x8x8x128xf32>
    %213 = math.tanh %212 : vector<3x8x8x128xf32>
    %cst_269 = arith.constant dense<0.000000e+00> : vector<3x8x128xf32>
    %214 = vector.multi_reduction <add>, %213, %cst_269 [1] : vector<3x8x8x128xf32> to vector<3x8x128xf32>
    %c0_270 = arith.constant 0 : index
    %c13 = arith.constant 13 : index
    %c0_271 = arith.constant 0 : index
    %c0_272 = arith.constant 0 : index
    %c0_273 = arith.constant 0 : index
    %215 = vector.load %arg3[%c0_270, %c13, %c0_271, %c0_272, %c0_273] : memref<1x16x3x8x128xf32, #tpu.memory_space<vmem>>, vector<1x1x3x8x128xf32>
    %216 = vector.shape_cast %215 : vector<1x1x3x8x128xf32> to vector<3x8x128xf32>
    %217 = arith.addf %216, %214 : vector<3x8x128xf32>
    %c0_274 = arith.constant 0 : index
    %c13_275 = arith.constant 13 : index
    %c0_276 = arith.constant 0 : index
    %c0_277 = arith.constant 0 : index
    %c0_278 = arith.constant 0 : index
    %218 = vector.load %arg3[%c0_274, %c13_275, %c0_276, %c0_277, %c0_278] : memref<1x16x3x8x128xf32, #tpu.memory_space<vmem>>, vector<1x1x3x8x128xf32>
    %219 = vector.shape_cast %218 : vector<1x1x3x8x128xf32> to vector<3x8x128xf32>
    %220 = vector.shape_cast %217 : vector<3x8x128xf32> to vector<1x1x3x8x128xf32>
    tpu.vector_store %arg3[%c0_274, %c13_275, %c0_276, %c0_277, %c0_278], %220 {strides = array<i32>} : memref<1x16x3x8x128xf32, #tpu.memory_space<vmem>>, vector<1x1x3x8x128xf32>,
    %c0_279 = arith.constant 0 : index
    %c12_280 = arith.constant 12 : index
    %c0_281 = arith.constant 0 : index
    %c0_282 = arith.constant 0 : index
    %c0_283 = arith.constant 0 : index
    %221 = vector.load %arg3[%c0_279, %c12_280, %c0_281, %c0_282, %c0_283] : memref<1x16x3x8x128xf32, #tpu.memory_space<vmem>>, vector<1x1x3x8x128xf32>
    %222 = vector.shape_cast %221 : vector<1x1x3x8x128xf32> to vector<3x8x128xf32>
    %223 = arith.subf %222, %214 : vector<3x8x128xf32>
    %c0_284 = arith.constant 0 : index
    %c12_285 = arith.constant 12 : index
    %c0_286 = arith.constant 0 : index
    %c0_287 = arith.constant 0 : index
    %c0_288 = arith.constant 0 : index
    %224 = vector.load %arg3[%c0_284, %c12_285, %c0_286, %c0_287, %c0_288] : memref<1x16x3x8x128xf32, #tpu.memory_space<vmem>>, vector<1x1x3x8x128xf32>
    %225 = vector.shape_cast %224 : vector<1x1x3x8x128xf32> to vector<3x8x128xf32>
    %226 = vector.shape_cast %223 : vector<3x8x128xf32> to vector<1x1x3x8x128xf32>
    tpu.vector_store %arg3[%c0_284, %c12_285, %c0_286, %c0_287, %c0_288], %226 {strides = array<i32>} : memref<1x16x3x8x128xf32, #tpu.memory_space<vmem>>, vector<1x1x3x8x128xf32>,
    %cst_289 = arith.constant 1.750000e+01 : f32
    %227 = vector.broadcast %cst_289 : f32 to vector<3x8x8x128xf32>
    %228 = arith.subf %8, %227 : vector<3x8x8x128xf32>
    %229 = math.tanh %228 : vector<3x8x8x128xf32>
    %cst_290 = arith.constant dense<0.000000e+00> : vector<3x8x128xf32>
    %230 = vector.multi_reduction <add>, %229, %cst_290 [1] : vector<3x8x8x128xf32> to vector<3x8x128xf32>
    %c0_291 = arith.constant 0 : index
    %c14 = arith.constant 14 : index
    %c0_292 = arith.constant 0 : index
    %c0_293 = arith.constant 0 : index
    %c0_294 = arith.constant 0 : index
    %231 = vector.load %arg3[%c0_291, %c14, %c0_292, %c0_293, %c0_294] : memref<1x16x3x8x128xf32, #tpu.memory_space<vmem>>, vector<1x1x3x8x128xf32>
    %232 = vector.shape_cast %231 : vector<1x1x3x8x128xf32> to vector<3x8x128xf32>
    %233 = arith.addf %232, %230 : vector<3x8x128xf32>
    %c0_295 = arith.constant 0 : index
    %c14_296 = arith.constant 14 : index
    %c0_297 = arith.constant 0 : index
    %c0_298 = arith.constant 0 : index
    %c0_299 = arith.constant 0 : index
    %234 = vector.load %arg3[%c0_295, %c14_296, %c0_297, %c0_298, %c0_299] : memref<1x16x3x8x128xf32, #tpu.memory_space<vmem>>, vector<1x1x3x8x128xf32>
    %235 = vector.shape_cast %234 : vector<1x1x3x8x128xf32> to vector<3x8x128xf32>
    %236 = vector.shape_cast %233 : vector<3x8x128xf32> to vector<1x1x3x8x128xf32>
    tpu.vector_store %arg3[%c0_295, %c14_296, %c0_297, %c0_298, %c0_299], %236 {strides = array<i32>} : memref<1x16x3x8x128xf32, #tpu.memory_space<vmem>>, vector<1x1x3x8x128xf32>,
    %c0_300 = arith.constant 0 : index
    %c13_301 = arith.constant 13 : index
    %c0_302 = arith.constant 0 : index
    %c0_303 = arith.constant 0 : index
    %c0_304 = arith.constant 0 : index
    %237 = vector.load %arg3[%c0_300, %c13_301, %c0_302, %c0_303, %c0_304] : memref<1x16x3x8x128xf32, #tpu.memory_space<vmem>>, vector<1x1x3x8x128xf32>
    %238 = vector.shape_cast %237 : vector<1x1x3x8x128xf32> to vector<3x8x128xf32>
    %239 = arith.subf %238, %230 : vector<3x8x128xf32>
    %c0_305 = arith.constant 0 : index
    %c13_306 = arith.constant 13 : index
    %c0_307 = arith.constant 0 : index
    %c0_308 = arith.constant 0 : index
    %c0_309 = arith.constant 0 : index
    %240 = vector.load %arg3[%c0_305, %c13_306, %c0_307, %c0_308, %c0_309] : memref<1x16x3x8x128xf32, #tpu.memory_space<vmem>>, vector<1x1x3x8x128xf32>
    %241 = vector.shape_cast %240 : vector<1x1x3x8x128xf32> to vector<3x8x128xf32>
    %242 = vector.shape_cast %239 : vector<3x8x128xf32> to vector<1x1x3x8x128xf32>
    tpu.vector_store %arg3[%c0_305, %c13_306, %c0_307, %c0_308, %c0_309], %242 {strides = array<i32>} : memref<1x16x3x8x128xf32, #tpu.memory_space<vmem>>, vector<1x1x3x8x128xf32>,
    %cst_310 = arith.constant 1.875000e+01 : f32
    %243 = vector.broadcast %cst_310 : f32 to vector<3x8x8x128xf32>
    %244 = arith.subf %8, %243 : vector<3x8x8x128xf32>
    %245 = math.tanh %244 : vector<3x8x8x128xf32>
    %cst_311 = arith.constant dense<0.000000e+00> : vector<3x8x128xf32>
    %246 = vector.multi_reduction <add>, %245, %cst_311 [1] : vector<3x8x8x128xf32> to vector<3x8x128xf32>
    %c0_312 = arith.constant 0 : index
    %c15 = arith.constant 15 : index
    %c0_313 = arith.constant 0 : index
    %c0_314 = arith.constant 0 : index
    %c0_315 = arith.constant 0 : index
    %247 = vector.load %arg3[%c0_312, %c15, %c0_313, %c0_314, %c0_315] : memref<1x16x3x8x128xf32, #tpu.memory_space<vmem>>, vector<1x1x3x8x128xf32>
    %248 = vector.shape_cast %247 : vector<1x1x3x8x128xf32> to vector<3x8x128xf32>
    %249 = arith.addf %248, %246 : vector<3x8x128xf32>
    %c0_316 = arith.constant 0 : index
    %c15_317 = arith.constant 15 : index
    %c0_318 = arith.constant 0 : index
    %c0_319 = arith.constant 0 : index
    %c0_320 = arith.constant 0 : index
    %250 = vector.load %arg3[%c0_316, %c15_317, %c0_318, %c0_319, %c0_320] : memref<1x16x3x8x128xf32, #tpu.memory_space<vmem>>, vector<1x1x3x8x128xf32>
    %251 = vector.shape_cast %250 : vector<1x1x3x8x128xf32> to vector<3x8x128xf32>
    %252 = vector.shape_cast %249 : vector<3x8x128xf32> to vector<1x1x3x8x128xf32>
    tpu.vector_store %arg3[%c0_316, %c15_317, %c0_318, %c0_319, %c0_320], %252 {strides = array<i32>} : memref<1x16x3x8x128xf32, #tpu.memory_space<vmem>>, vector<1x1x3x8x128xf32>,
    %c0_321 = arith.constant 0 : index
    %c14_322 = arith.constant 14 : index
    %c0_323 = arith.constant 0 : index
    %c0_324 = arith.constant 0 : index
    %c0_325 = arith.constant 0 : index
    %253 = vector.load %arg3[%c0_321, %c14_322, %c0_323, %c0_324, %c0_325] : memref<1x16x3x8x128xf32, #tpu.memory_space<vmem>>, vector<1x1x3x8x128xf32>
    %254 = vector.shape_cast %253 : vector<1x1x3x8x128xf32> to vector<3x8x128xf32>
    %255 = arith.subf %254, %246 : vector<3x8x128xf32>
    %c0_326 = arith.constant 0 : index
    %c14_327 = arith.constant 14 : index
    %c0_328 = arith.constant 0 : index
    %c0_329 = arith.constant 0 : index
    %c0_330 = arith.constant 0 : index
    %256 = vector.load %arg3[%c0_326, %c14_327, %c0_328, %c0_329, %c0_330] : memref<1x16x3x8x128xf32, #tpu.memory_space<vmem>>, vector<1x1x3x8x128xf32>
    %257 = vector.shape_cast %256 : vector<1x1x3x8x128xf32> to vector<3x8x128xf32>
    %258 = vector.shape_cast %255 : vector<3x8x128xf32> to vector<1x1x3x8x128xf32>
    tpu.vector_store %arg3[%c0_326, %c14_327, %c0_328, %c0_329, %c0_330], %258 {strides = array<i32>} : memref<1x16x3x8x128xf32, #tpu.memory_space<vmem>>, vector<1x1x3x8x128xf32>,
    %cst_331 = arith.constant 2.000000e+01 : f32
    %259 = vector.broadcast %cst_331 : f32 to vector<3x8x8x128xf32>
    %260 = arith.subf %8, %259 : vector<3x8x8x128xf32>
    %261 = math.tanh %260 : vector<3x8x8x128xf32>
    %cst_332 = arith.constant dense<0.000000e+00> : vector<3x8x128xf32>
    %262 = vector.multi_reduction <add>, %261, %cst_332 [1] : vector<3x8x8x128xf32> to vector<3x8x128xf32>
    %c0_333 = arith.constant 0 : index
    %c15_334 = arith.constant 15 : index
    %c0_335 = arith.constant 0 : index
    %c0_336 = arith.constant 0 : index
    %c0_337 = arith.constant 0 : index
    %263 = vector.load %arg3[%c0_333, %c15_334, %c0_335, %c0_336, %c0_337] : memref<1x16x3x8x128xf32, #tpu.memory_space<vmem>>, vector<1x1x3x8x128xf32>
    %264 = vector.shape_cast %263 : vector<1x1x3x8x128xf32> to vector<3x8x128xf32>
    %265 = arith.subf %264, %262 : vector<3x8x128xf32>
    %c0_338 = arith.constant 0 : index
    %c15_339 = arith.constant 15 : index
    %c0_340 = arith.constant 0 : index
    %c0_341 = arith.constant 0 : index
    %c0_342 = arith.constant 0 : index
    %266 = vector.load %arg3[%c0_338, %c15_339, %c0_340, %c0_341, %c0_342] : memref<1x16x3x8x128xf32, #tpu.memory_space<vmem>>, vector<1x1x3x8x128xf32>
    %267 = vector.shape_cast %266 : vector<1x1x3x8x128xf32> to vector<3x8x128xf32>
    %268 = vector.shape_cast %265 : vector<3x8x128xf32> to vector<1x1x3x8x128xf32>
    tpu.vector_store %arg3[%c0_338, %c15_339, %c0_340, %c0_341, %c0_342], %268 {strides = array<i32>} : memref<1x16x3x8x128xf32, #tpu.memory_space<vmem>>, vector<1x1x3x8x128xf32>,
    %c1_i32 = arith.constant 1 : i32
    return
  }
  func.func @transform_0(%arg0: i32, %arg1: i32) -> (i32, i32, i32, i32) {
    %c1_i32 = arith.constant 1 : i32
    %0 = arith.muli %arg0, %c1_i32 : i32
    %1 = arith.addi %0, %arg1 : i32
    %c0_i32 = arith.constant 0 : i32
    %c0_i32_0 = arith.constant 0 : i32
    %c0_i32_1 = arith.constant 0 : i32
    %c0_i32_2 = arith.constant 0 : i32
    return %c0_i32, %1, %c0_i32_0, %c0_i32_1 : i32, i32, i32, i32
  }
  func.func @transform_1(%arg0: i32, %arg1: i32) -> (i32, i32, i32, i32, i32) {
    %c0_i32 = arith.constant 0 : i32
    %c0_i32_0 = arith.constant 0 : i32
    %c0_i32_1 = arith.constant 0 : i32
    %c0_i32_2 = arith.constant 0 : i32
    %c0_i32_3 = arith.constant 0 : i32
    return %arg0, %c0_i32, %c0_i32_0, %c0_i32_1, %c0_i32_2 : i32, i32, i32, i32, i32
  }
}

</mosaic_0001>

<llo_original>
// kernel: tpu_custom_call.1
$region0: #{tpu_custom_call.1}
  #allocation0 [shape = 'u32[]', space=smem, size = 0x4, offset = 0x4, fixed_abs, tag = 'smem constant byte address 0x4 - core index']
  #allocation1 [shape = 'u32[144,128]{1,0:T(1,128)}', space=vmem, size = 0x12000, scoped, tag = 'internal scratch']
  %s0 = inlined_call_operand.hbm [shape: f32[3,8,8,128], index: 0, kind: input, shape index: {}]
  %s1 = inlined_call_operand.hbm [shape: f32[1,16,3,8,128], index: 1, kind: output, shape index: {}]
  %s2 = sld [smem:[#allocation0]]
  $region22: #{tpu_custom_call.1} parent=0
    _
  %s4 = ssub.s32 1, %s2
  %s5 = scalar_select 0, %s4, %s2
  $region1: #{tpu_custom_call.1} parent=0
    #allocation2 [shape = 'u8[98304]{0}', space=vmem, size = 0x18000, scoped, tag = 'input window, operand 0, single buffered']
    #allocation3 [shape = 's32[1]{0}', space=sflag, size = 0x4, scoped, tag = 'scoped memory for tpu_custom_call.1']
    #allocation4 [shape = 's32[1]{0}', space=sflag, size = 0x4, scoped, tag = 'scoped memory for tpu_custom_call.1']
    #allocation5 [shape = 'u8[196608]{0}', space=vmem, size = 0x30000, scoped, tag = 'output window, operand 0, single buffered']
    %6 = vsyncpa [#allocation3], 0
    %7 = vsyncpa [#allocation4], 0
    // Predicated region
    $region2: #{tpu_custom_call.1} parent=1 // pred_check
      _
    $region3: #{tpu_custom_call.1} parent=1 // pred_check_branch
      %9 = sbr.rel (0) target = $region5
    $region4: #{tpu_custom_call.1} parent=1 // pred_region
      %s10 = sadd.s32 0, 0
      %s11 = smul.u32 8, %s10
      %s13 = ssub.s32 3072, 3072
      %14 = vsyncadd [#allocation3], %s13
      %s15 = smul.addr %s11, 128
      %s16 = scalar_lea.hbm %s0, %s15
      %s17 = sshll.u32 [#allocation2], 4
      %s18 = int_to_ptr.vmem [resolvable:$true] %s17
      %23 = dma.hbm_to_vmem [thread:$0]  %s16, 3072, %s18, [#allocation3], 128, 128, 8
    $region5: #{tpu_custom_call.1} parent=1 // pred_fallthru
      _
    // Predicated region
    $region6: #{tpu_custom_call.1} parent=1 // pred_check
      _
    $region7: #{tpu_custom_call.1} parent=1 // pred_check_branch
      %25 = sbr.rel (0) target = $region9
    $region8: #{tpu_custom_call.1} parent=1 // pred_region
      %26 = dma.done [#allocation3], 3072
    $region9: #{tpu_custom_call.1} parent=1 // pred_fallthru
      _
    %s27 = sadd.s32 0, 0
    %s28 = smul.u32 8, %s27
    %p29 = scmp.eq.s32.totalorder 0, 0
    // Predicated region
    $region10: #{tpu_custom_call.1} parent=1 // pred_check
      %p30 = pneg %p29
    $region11: #{tpu_custom_call.1} parent=1 // pred_check_branch
      %32 = sbr.rel (%p30) target = $region13
    $region12: #{tpu_custom_call.1} parent=1 // pred_region
      %33 = vst [vmem:[#allocation5] sm:$0xff] 0.0
      %34 = vst [vmem:[#allocation5 + $0x8] sm:$0xff] 0.0
      %35 = vst [vmem:[#allocation5 + $0x10] sm:$0xff] 0.0
      %36 = vst [vmem:[#allocation5 + $0x18] sm:$0xff] 0.0
      %37 = vst [vmem:[#allocation5 + $0x20] sm:$0xff] 0.0
      %38 = vst [vmem:[#allocation5 + $0x28] sm:$0xff] 0.0
      %39 = vst [vmem:[#allocation5 + $0x30] sm:$0xff] 0.0
      %40 = vst [vmem:[#allocation5 + $0x38] sm:$0xff] 0.0
      %41 = vst [vmem:[#allocation5 + $0x40] sm:$0xff] 0.0
      %42 = vst [vmem:[#allocation5 + $0x48] sm:$0xff] 0.0
      %43 = vst [vmem:[#allocation5 + $0x50] sm:$0xff] 0.0
      %44 = vst [vmem:[#allocation5 + $0x58] sm:$0xff] 0.0
      %45 = vst [vmem:[#allocation5 + $0x60] sm:$0xff] 0.0
      %46 = vst [vmem:[#allocation5 + $0x68] sm:$0xff] 0.0
      %47 = vst [vmem:[#allocation5 + $0x70] sm:$0xff] 0.0
      %48 = vst [vmem:[#allocation5 + $0x78] sm:$0xff] 0.0
      %49 = vst [vmem:[#allocation5 + $0x80] sm:$0xff] 0.0
      %50 = vst [vmem:[#allocation5 + $0x88] sm:$0xff] 0.0
      %51 = vst [vmem:[#allocation5 + $0x90] sm:$0xff] 0.0
      %52 = vst [vmem:[#allocation5 + $0x98] sm:$0xff] 0.0
      %53 = vst [vmem:[#allocation5 + $0xa0] sm:$0xff] 0.0
      %54 = vst [vmem:[#allocation5 + $0xa8] sm:$0xff] 0.0
      %55 = vst [vmem:[#allocation5 + $0xb0] sm:$0xff] 0.0
      %56 = vst [vmem:[#allocation5 + $0xb8] sm:$0xff] 0.0
      %57 = vst [vmem:[#allocation5 + $0xc0] sm:$0xff] 0.0
      %58 = vst [vmem:[#allocation5 + $0xc8] sm:$0xff] 0.0
      %59 = vst [vmem:[#allocation5 + $0xd0] sm:$0xff] 0.0
      %60 = vst [vmem:[#allocation5 + $0xd8] sm:$0xff] 0.0
      %61 = vst [vmem:[#allocation5 + $0xe0] sm:$0xff] 0.0
      %62 = vst [vmem:[#allocation5 + $0xe8] sm:$0xff] 0.0
      %63 = vst [vmem:[#allocation5 + $0xf0] sm:$0xff] 0.0
      %64 = vst [vmem:[#allocation5 + $0xf8] sm:$0xff] 0.0
      %65 = vst [vmem:[#allocation5 + $0x100] sm:$0xff] 0.0
      %66 = vst [vmem:[#allocation5 + $0x108] sm:$0xff] 0.0
      %67 = vst [vmem:[#allocation5 + $0x110] sm:$0xff] 0.0
      %68 = vst [vmem:[#allocation5 + $0x118] sm:$0xff] 0.0
      %69 = vst [vmem:[#allocation5 + $0x120] sm:$0xff] 0.0
      %70 = vst [vmem:[#allocation5 + $0x128] sm:$0xff] 0.0
      %71 = vst [vmem:[#allocation5 + $0x130] sm:$0xff] 0.0
      %72 = vst [vmem:[#allocation5 + $0x138] sm:$0xff] 0.0
      %73 = vst [vmem:[#allocation5 + $0x140] sm:$0xff] 0.0
      %74 = vst [vmem:[#allocation5 + $0x148] sm:$0xff] 0.0
      %75 = vst [vmem:[#allocation5 + $0x150] sm:$0xff] 0.0
      %76 = vst [vmem:[#allocation5 + $0x158] sm:$0xff] 0.0
      %77 = vst [vmem:[#allocation5 + $0x160] sm:$0xff] 0.0
      %78 = vst [vmem:[#allocation5 + $0x168] sm:$0xff] 0.0
      %79 = vst [vmem:[#allocation5 + $0x170] sm:$0xff] 0.0
      %80 = vst [vmem:[#allocation5 + $0x178] sm:$0xff] 0.0
    $region13: #{tpu_custom_call.1} parent=1 // pred_fallthru
      _
    %s81 = smul.u32 0, 8
    %s82 = scalar_lea.vmem [#allocation2], %s81
    %v83 = vld [vmem:[%s82] sm:$0xff]
    %v84 = vld [vmem:[%s82 + $0x8] sm:$0xff]
    %v85 = vld [vmem:[%s82 + $0x10] sm:$0xff]
    %v86 = vld [vmem:[%s82 + $0x18] sm:$0xff]
    %v87 = vld [vmem:[%s82 + $0x20] sm:$0xff]
    %v88 = vld [vmem:[%s82 + $0x28] sm:$0xff]
    %v89 = vld [vmem:[%s82 + $0x30] sm:$0xff]
    %v90 = vld [vmem:[%s82 + $0x38] sm:$0xff]
    %v91 = vld [vmem:[%s82 + $0x40] sm:$0xff]
    %v92 = vld [vmem:[%s82 + $0x48] sm:$0xff]
    %v93 = vld [vmem:[%s82 + $0x50] sm:$0xff]
    %v94 = vld [vmem:[%s82 + $0x58] sm:$0xff]
    %v95 = vld [vmem:[%s82 + $0x60] sm:$0xff]
    %v96 = vld [vmem:[%s82 + $0x68] sm:$0xff]
    %v97 = vld [vmem:[%s82 + $0x70] sm:$0xff]
    %v98 = vld [vmem:[%s82 + $0x78] sm:$0xff]
    %v99 = vld [vmem:[%s82 + $0x80] sm:$0xff]
    %v100 = vld [vmem:[%s82 + $0x88] sm:$0xff]
    %v101 = vld [vmem:[%s82 + $0x90] sm:$0xff]
    %v102 = vld [vmem:[%s82 + $0x98] sm:$0xff]
    %v103 = vld [vmem:[%s82 + $0xa0] sm:$0xff]
    %v104 = vld [vmem:[%s82 + $0xa8] sm:$0xff]
    %v105 = vld [vmem:[%s82 + $0xb0] sm:$0xff]
    %v106 = vld [vmem:[%s82 + $0xb8] sm:$0xff]
    %v107 = vmul.f32 %v83, 20.0
    %v108 = vmul.f32 %v84, 20.0
    %v109 = vmul.f32 %v85, 20.0
    %v110 = vmul.f32 %v86, 20.0
    %v111 = vmul.f32 %v87, 20.0
    %v112 = vmul.f32 %v88, 20.0
    %v113 = vmul.f32 %v89, 20.0
    %v114 = vmul.f32 %v90, 20.0
    %v115 = vmul.f32 %v91, 20.0
    %v116 = vmul.f32 %v92, 20.0
    %v117 = vmul.f32 %v93, 20.0
    %v118 = vmul.f32 %v94, 20.0
    %v119 = vmul.f32 %v95, 20.0
    %v120 = vmul.f32 %v96, 20.0
    %v121 = vmul.f32 %v97, 20.0
    %v122 = vmul.f32 %v98, 20.0
    %v123 = vmul.f32 %v99, 20.0
    %v124 = vmul.f32 %v100, 20.0
    %v125 = vmul.f32 %v101, 20.0
    %v126 = vmul.f32 %v102, 20.0
    %v127 = vmul.f32 %v103, 20.0
    %v128 = vmul.f32 %v104, 20.0
    %v129 = vmul.f32 %v105, 20.0
    %v130 = vmul.f32 %v106, 20.0
    %v131 = vtanh.pop %v107
    %v132 = vtanh.pop %v108
    %v133 = vtanh.pop %v109
    %v134 = vtanh.pop %v110
    %v135 = vtanh.pop %v111
    %v136 = vtanh.pop %v112
    %v137 = vtanh.pop %v113
    %v138 = vtanh.pop %v114
    %v139 = vtanh.pop %v115
    %v140 = vtanh.pop %v116
    %v141 = vtanh.pop %v117
    %v142 = vtanh.pop %v118
    %v143 = vtanh.pop %v119
    %v144 = vtanh.pop %v120
    %v145 = vtanh.pop %v121
    %v146 = vtanh.pop %v122
    %v147 = vtanh.pop %v123
    %v148 = vtanh.pop %v124
    %v149 = vtanh.pop %v125
    %v150 = vtanh.pop %v126
    %v151 = vtanh.pop %v127
    %v152 = vtanh.pop %v128
    %v153 = vtanh.pop %v129
    %v154 = vtanh.pop %v130
    %v155 = vadd.f32 %v131, %v132
    %v156 = vadd.f32 %v155, %v133
    %v157 = vadd.f32 %v156, %v134
    %v158 = vadd.f32 %v157, %v135
    %v159 = vadd.f32 %v158, %v136
    %v160 = vadd.f32 %v159, %v137
    %v161 = vadd.f32 %v160, %v138
    %v162 = vadd.f32 %v139, %v140
    %v163 = vadd.f32 %v162, %v141
    %v164 = vadd.f32 %v163, %v142
    %v165 = vadd.f32 %v164, %v143
    %v166 = vadd.f32 %v165, %v144
    %v167 = vadd.f32 %v166, %v145
    %v168 = vadd.f32 %v167, %v146
    %v169 = vadd.f32 %v147, %v148
    %v170 = vadd.f32 %v169, %v149
    %v171 = vadd.f32 %v170, %v150
    %v172 = vadd.f32 %v171, %v151
    %v173 = vadd.f32 %v172, %v152
    %v174 = vadd.f32 %v173, %v153
    %v175 = vadd.f32 %v174, %v154
    %v176 = vld [vmem:[#allocation5] sm:$0xff]
    %v177 = vld [vmem:[#allocation5 + $0x8] sm:$0xff]
    %v178 = vld [vmem:[#allocation5 + $0x10] sm:$0xff]
    %v179 = vadd.f32 %v176, %v161
    %v180 = vadd.f32 %v177, %v168
    %v181 = vadd.f32 %v178, %v175
    %182 = vst [vmem:[#allocation5] sm:$0xff] %v179
    %183 = vst [vmem:[#allocation5 + $0x8] sm:$0xff] %v180
    %184 = vst [vmem:[#allocation5 + $0x10] sm:$0xff] %v181
    %v185 = vsub.f32 %v107, 1.25
    %v186 = vsub.f32 %v108, 1.25
    %v187 = vsub.f32 %v109, 1.25
    %v188 = vsub.f32 %v110, 1.25
    %v189 = vsub.f32 %v111, 1.25
    %v190 = vsub.f32 %v112, 1.25
    %v191 = vsub.f32 %v113, 1.25
    %v192 = vsub.f32 %v114, 1.25
    %v193 = vsub.f32 %v115, 1.25
    %v194 = vsub.f32 %v116, 1.25
    %v195 = vsub.f32 %v117, 1.25
    %v196 = vsub.f32 %v118, 1.25
    %v197 = vsub.f32 %v119, 1.25
    %v198 = vsub.f32 %v120, 1.25
    %v199 = vsub.f32 %v121, 1.25
    %v200 = vsub.f32 %v122, 1.25
    %v201 = vsub.f32 %v123, 1.25
    %v202 = vsub.f32 %v124, 1.25
    %v203 = vsub.f32 %v125, 1.25
    %v204 = vsub.f32 %v126, 1.25
    %v205 = vsub.f32 %v127, 1.25
    %v206 = vsub.f32 %v128, 1.25
    %v207 = vsub.f32 %v129, 1.25
    %v208 = vsub.f32 %v130, 1.25
    %v209 = vtanh.pop %v185
    %v210 = vtanh.pop %v186
    %v211 = vtanh.pop %v187
    %v212 = vtanh.pop %v188
    %v213 = vtanh.pop %v189
    %v214 = vtanh.pop %v190
    %v215 = vtanh.pop %v191
    %v216 = vtanh.pop %v192
    %v217 = vtanh.pop %v193
    %v218 = vtanh.pop %v194
    %v219 = vtanh.pop %v195
    %v220 = vtanh.pop %v196
    %v221 = vtanh.pop %v197
    %v222 = vtanh.pop %v198
    %v223 = vtanh.pop %v199
    %v224 = vtanh.pop %v200
    %v225 = vtanh.pop %v201
    %v226 = vtanh.pop %v202
    %v227 = vtanh.pop %v203
    %v228 = vtanh.pop %v204
    %v229 = vtanh.pop %v205
    %v230 = vtanh.pop %v206
    %v231 = vtanh.pop %v207
    %v232 = vtanh.pop %v208
    %v233 = vadd.f32 %v209, %v210
    %v234 = vadd.f32 %v233, %v211
    %v235 = vadd.f32 %v234, %v212
    %v236 = vadd.f32 %v235, %v213
    %v237 = vadd.f32 %v236, %v214
    %v238 = vadd.f32 %v237, %v215
    %v239 = vadd.f32 %v238, %v216
    %v240 = vadd.f32 %v217, %v218
    %v241 = vadd.f32 %v240, %v219
    %v242 = vadd.f32 %v241, %v220
    %v243 = vadd.f32 %v242, %v221
    %v244 = vadd.f32 %v243, %v222
    %v245 = vadd.f32 %v244, %v223
    %v246 = vadd.f32 %v245, %v224
    %v247 = vadd.f32 %v225, %v226
    %v248 = vadd.f32 %v247, %v227
    %v249 = vadd.f32 %v248, %v228
    %v250 = vadd.f32 %v249, %v229
    %v251 = vadd.f32 %v250, %v230
    %v252 = vadd.f32 %v251, %v231
    %v253 = vadd.f32 %v252, %v232
    %s254 = scalar_lea.vmem [#allocation5], 24
    %v255 = vld [vmem:[%s254] sm:$0xff]
    %v256 = vld [vmem:[%s254 + $0x8] sm:$0xff]
    %v257 = vld [vmem:[%s254 + $0x10] sm:$0xff]
    %v258 = vadd.f32 %v255, %v239
    %v259 = vadd.f32 %v256, %v246
    %v260 = vadd.f32 %v257, %v253
    %261 = vst [vmem:[%s254] sm:$0xff] %v258
    %262 = vst [vmem:[%s254 + $0x8] sm:$0xff] %v259
    %263 = vst [vmem:[%s254 + $0x10] sm:$0xff] %v260
    %v264 = vld [vmem:[#allocation5] sm:$0xff]
    %v265 = vld [vmem:[#allocation5 + $0x8] sm:$0xff]
    %v266 = vld [vmem:[#allocation5 + $0x10] sm:$0xff]
    %v267 = vsub.f32 %v264, %v239
    %v268 = vsub.f32 %v265, %v246
    %v269 = vsub.f32 %v266, %v253
    %270 = vst [vmem:[#allocation5] sm:$0xff] %v267
    %271 = vst [vmem:[#allocation5 + $0x8] sm:$0xff] %v268
    %272 = vst [vmem:[#allocation5 + $0x10] sm:$0xff] %v269
    %v273 = vsub.f32 %v107, 2.5
    %v274 = vsub.f32 %v108, 2.5
    %v275 = vsub.f32 %v109, 2.5
    %v276 = vsub.f32 %v110, 2.5
    %v277 = vsub.f32 %v111, 2.5
    %v278 = vsub.f32 %v112, 2.5
    %v279 = vsub.f32 %v113, 2.5
    %v280 = vsub.f32 %v114, 2.5
    %v281 = vsub.f32 %v115, 2.5
    %v282 = vsub.f32 %v116, 2.5
    %v283 = vsub.f32 %v117, 2.5
    %v284 = vsub.f32 %v118, 2.5
    %v285 = vsub.f32 %v119, 2.5
    %v286 = vsub.f32 %v120, 2.5
    %v287 = vsub.f32 %v121, 2.5
    %v288 = vsub.f32 %v122, 2.5
    %v289 = vsub.f32 %v123, 2.5
    %v290 = vsub.f32 %v124, 2.5
    %v291 = vsub.f32 %v125, 2.5
    %v292 = vsub.f32 %v126, 2.5
    %v293 = vsub.f32 %v127, 2.5
    %v294 = vsub.f32 %v128, 2.5
    %v295 = vsub.f32 %v129, 2.5
    %v296 = vsub.f32 %v130, 2.5
    %v297 = vtanh.pop %v273
    %v298 = vtanh.pop %v274
    %v299 = vtanh.pop %v275
    %v300 = vtanh.pop %v276
    %v301 = vtanh.pop %v277
    %v302 = vtanh.pop %v278
    %v303 = vtanh.pop %v279
    %v304 = vtanh.pop %v280
    %v305 = vtanh.pop %v281
    %v306 = vtanh.pop %v282
    %v307 = vtanh.pop %v283
    %v308 = vtanh.pop %v284
    %v309 = vtanh.pop %v285
    %v310 = vtanh.pop %v286
    %v311 = vtanh.pop %v287
    %v312 = vtanh.pop %v288
    %v313 = vtanh.pop %v289
    %v314 = vtanh.pop %v290
    %v315 = vtanh.pop %v291
    %v316 = vtanh.pop %v292
    %v317 = vtanh.pop %v293
    %v318 = vtanh.pop %v294
    %v319 = vtanh.pop %v295
    %v320 = vtanh.pop %v296
    %v321 = vadd.f32 %v297, %v298
    %v322 = vadd.f32 %v321, %v299
    %v323 = vadd.f32 %v322, %v300
    %v324 = vadd.f32 %v323, %v301
    %v325 = vadd.f32 %v324, %v302
    %v326 = vadd.f32 %v325, %v303
    %v327 = vadd.f32 %v326, %v304
    %v328 = vadd.f32 %v305, %v306
    %v329 = vadd.f32 %v328, %v307
    %v330 = vadd.f32 %v329, %v308
    %v331 = vadd.f32 %v330, %v309
    %v332 = vadd.f32 %v331, %v310
    %v333 = vadd.f32 %v332, %v311
    %v334 = vadd.f32 %v333, %v312
    %v335 = vadd.f32 %v313, %v314
    %v336 = vadd.f32 %v335, %v315
    %v337 = vadd.f32 %v336, %v316
    %v338 = vadd.f32 %v337, %v317
    %v339 = vadd.f32 %v338, %v318
    %v340 = vadd.f32 %v339, %v319
    %v341 = vadd.f32 %v340, %v320
    %s342 = scalar_lea.vmem [#allocation5], 48
    %v343 = vld [vmem:[%s342] sm:$0xff]
    %v344 = vld [vmem:[%s342 + $0x8] sm:$0xff]
    %v345 = vld [vmem:[%s342 + $0x10] sm:$0xff]
    %v346 = vadd.f32 %v343, %v327
    %v347 = vadd.f32 %v344, %v334
    %v348 = vadd.f32 %v345, %v341
    %349 = vst [vmem:[%s342] sm:$0xff] %v346
    %350 = vst [vmem:[%s342 + $0x8] sm:$0xff] %v347
    %351 = vst [vmem:[%s342 + $0x10] sm:$0xff] %v348
    %v352 = vld [vmem:[%s254] sm:$0xff]
    %v353 = vld [vmem:[%s254 + $0x8] sm:$0xff]
    %v354 = vld [vmem:[%s254 + $0x10] sm:$0xff]
    %v355 = vsub.f32 %v352, %v327
    %v356 = vsub.f32 %v353, %v334
    %v357 = vsub.f32 %v354, %v341
    %358 = vst [vmem:[%s254] sm:$0xff] %v355
    %359 = vst [vmem:[%s254 + $0x8] sm:$0xff] %v356
    %360 = vst [vmem:[%s254 + $0x10] sm:$0xff] %v357
    %v361 = vsub.f32 %v107, 3.75
    %v362 = vsub.f32 %v108, 3.75
    %v363 = vsub.f32 %v109, 3.75
    %v364 = vsub.f32 %v110, 3.75
    %v365 = vsub.f32 %v111, 3.75
    %v366 = vsub.f32 %v112, 3.75
    %v367 = vsub.f32 %v113, 3.75
    %v368 = vsub.f32 %v114, 3.75
    %v369 = vsub.f32 %v115, 3.75
    %v370 = vsub.f32 %v116, 3.75
    %v371 = vsub.f32 %v117, 3.75
    %v372 = vsub.f32 %v118, 3.75
    %v373 = vsub.f32 %v119, 3.75
    %v374 = vsub.f32 %v120, 3.75
    %v375 = vsub.f32 %v121, 3.75
    %v376 = vsub.f32 %v122, 3.75
    %v377 = vsub.f32 %v123, 3.75
    %v378 = vsub.f32 %v124, 3.75
    %v379 = vsub.f32 %v125, 3.75
    %v380 = vsub.f32 %v126, 3.75
    %v381 = vsub.f32 %v127, 3.75
    %v382 = vsub.f32 %v128, 3.75
    %v383 = vsub.f32 %v129, 3.75
    %v384 = vsub.f32 %v130, 3.75
    %v385 = vtanh.pop %v361
    %v386 = vtanh.pop %v362
    %v387 = vtanh.pop %v363
    %v388 = vtanh.pop %v364
    %v389 = vtanh.pop %v365
    %v390 = vtanh.pop %v366
    %v391 = vtanh.pop %v367
    %v392 = vtanh.pop %v368
    %v393 = vtanh.pop %v369
    %v394 = vtanh.pop %v370
    %v395 = vtanh.pop %v371
    %v396 = vtanh.pop %v372
    %v397 = vtanh.pop %v373
    %v398 = vtanh.pop %v374
    %v399 = vtanh.pop %v375
    %v400 = vtanh.pop %v376
    %v401 = vtanh.pop %v377
    %v402 = vtanh.pop %v378
    %v403 = vtanh.pop %v379
    %v404 = vtanh.pop %v380
    %v405 = vtanh.pop %v381
    %v406 = vtanh.pop %v382
    %v407 = vtanh.pop %v383
    %v408 = vtanh.pop %v384
    %v409 = vadd.f32 %v385, %v386
    %v410 = vadd.f32 %v409, %v387
    %v411 = vadd.f32 %v410, %v388
    %v412 = vadd.f32 %v411, %v389
    %v413 = vadd.f32 %v412, %v390
    %v414 = vadd.f32 %v413, %v391
    %v415 = vadd.f32 %v414, %v392
    %v416 = vadd.f32 %v393, %v394
    %v417 = vadd.f32 %v416, %v395
    %v418 = vadd.f32 %v417, %v396
    %v419 = vadd.f32 %v418, %v397
    %v420 = vadd.f32 %v419, %v398
    %v421 = vadd.f32 %v420, %v399
    %v422 = vadd.f32 %v421, %v400
    %v423 = vadd.f32 %v401, %v402
    %v424 = vadd.f32 %v423, %v403
    %v425 = vadd.f32 %v424, %v404
    %v426 = vadd.f32 %v425, %v405
    %v427 = vadd.f32 %v426, %v406
    %v428 = vadd.f32 %v427, %v407
    %v429 = vadd.f32 %v428, %v408
    %s430 = scalar_lea.vmem [#allocation5], 72
    %v431 = vld [vmem:[%s430] sm:$0xff]
    %v432 = vld [vmem:[%s430 + $0x8] sm:$0xff]
    %v433 = vld [vmem:[%s430 + $0x10] sm:$0xff]
    %v434 = vadd.f32 %v431, %v415
    %v435 = vadd.f32 %v432, %v422
    %v436 = vadd.f32 %v433, %v429
    %437 = vst [vmem:[%s430] sm:$0xff] %v434
    %438 = vst [vmem:[%s430 + $0x8] sm:$0xff] %v435
    %439 = vst [vmem:[%s430 + $0x10] sm:$0xff] %v436
    %v440 = vld [vmem:[%s342] sm:$0xff]
    %v441 = vld [vmem:[%s342 + $0x8] sm:$0xff]
    %v442 = vld [vmem:[%s342 + $0x10] sm:$0xff]
    %v443 = vsub.f32 %v440, %v415
    %v444 = vsub.f32 %v441, %v422
    %v445 = vsub.f32 %v442, %v429
    %446 = vst [vmem:[%s342] sm:$0xff] %v443
    %447 = vst [vmem:[%s342 + $0x8] sm:$0xff] %v444
    %448 = vst [vmem:[%s342 + $0x10] sm:$0xff] %v445
    %v449 = vsub.f32 %v107, 5.0
    %v450 = vsub.f32 %v108, 5.0
    %v451 = vsub.f32 %v109, 5.0
    %v452 = vsub.f32 %v110, 5.0
    %v453 = vsub.f32 %v111, 5.0
    %v454 = vsub.f32 %v112, 5.0
    %v455 = vsub.f32 %v113, 5.0
    %v456 = vsub.f32 %v114, 5.0
    %v457 = vsub.f32 %v115, 5.0
    %v458 = vsub.f32 %v116, 5.0
    %v459 = vsub.f32 %v117, 5.0
    %v460 = vsub.f32 %v118, 5.0
    %v461 = vsub.f32 %v119, 5.0
    %v462 = vsub.f32 %v120, 5.0
    %v463 = vsub.f32 %v121, 5.0
    %v464 = vsub.f32 %v122, 5.0
    %v465 = vsub.f32 %v123, 5.0
    %v466 = vsub.f32 %v124, 5.0
    %v467 = vsub.f32 %v125, 5.0
    %v468 = vsub.f32 %v126, 5.0
    %v469 = vsub.f32 %v127, 5.0
    %v470 = vsub.f32 %v128, 5.0
    %v471 = vsub.f32 %v129, 5.0
    %v472 = vsub.f32 %v130, 5.0
    %v473 = vtanh.pop %v449
    %v474 = vtanh.pop %v450
    %v475 = vtanh.pop %v451
    %v476 = vtanh.pop %v452
    %v477 = vtanh.pop %v453
    %v478 = vtanh.pop %v454
    %v479 = vtanh.pop %v455
    %v480 = vtanh.pop %v456
    %v481 = vtanh.pop %v457
    %v482 = vtanh.pop %v458
    %v483 = vtanh.pop %v459
    %v484 = vtanh.pop %v460
    %v485 = vtanh.pop %v461
    %v486 = vtanh.pop %v462
    %v487 = vtanh.pop %v463
    %v488 = vtanh.pop %v464
    %v489 = vtanh.pop %v465
    %v490 = vtanh.pop %v466
    %v491 = vtanh.pop %v467
    %v492 = vtanh.pop %v468
    %v493 = vtanh.pop %v469
    %v494 = vtanh.pop %v470
    %v495 = vtanh.pop %v471
    %v496 = vtanh.pop %v472
    %v497 = vadd.f32 %v473, %v474
    %v498 = vadd.f32 %v497, %v475
    %v499 = vadd.f32 %v498, %v476
    %v500 = vadd.f32 %v499, %v477
    %v501 = vadd.f32 %v500, %v478
    %v502 = vadd.f32 %v501, %v479
    %v503 = vadd.f32 %v502, %v480
    %v504 = vadd.f32 %v481, %v482
    %v505 = vadd.f32 %v504, %v483
    %v506 = vadd.f32 %v505, %v484
    %v507 = vadd.f32 %v506, %v485
    %v508 = vadd.f32 %v507, %v486
    %v509 = vadd.f32 %v508, %v487
    %v510 = vadd.f32 %v509, %v488
    %v511 = vadd.f32 %v489, %v490
    %v512 = vadd.f32 %v511, %v491
    %v513 = vadd.f32 %v512, %v492
    %v514 = vadd.f32 %v513, %v493
    %v515 = vadd.f32 %v514, %v494
    %v516 = vadd.f32 %v515, %v495
    %v517 = vadd.f32 %v516, %v496
    %s518 = scalar_lea.vmem [#allocation5], 96
    %v519 = vld [vmem:[%s518] sm:$0xff]
    %v520 = vld [vmem:[%s518 + $0x8] sm:$0xff]
    %v521 = vld [vmem:[%s518 + $0x10] sm:$0xff]
    %v522 = vadd.f32 %v519, %v503
    %v523 = vadd.f32 %v520, %v510
    %v524 = vadd.f32 %v521, %v517
    %525 = vst [vmem:[%s518] sm:$0xff] %v522
    %526 = vst [vmem:[%s518 + $0x8] sm:$0xff] %v523
    %527 = vst [vmem:[%s518 + $0x10] sm:$0xff] %v524
    %v528 = vld [vmem:[%s430] sm:$0xff]
    %v529 = vld [vmem:[%s430 + $0x8] sm:$0xff]
    %v530 = vld [vmem:[%s430 + $0x10] sm:$0xff]
    %v531 = vsub.f32 %v528, %v503
    %v532 = vsub.f32 %v529, %v510
    %v533 = vsub.f32 %v530, %v517
    %534 = vst [vmem:[%s430] sm:$0xff] %v531
    %535 = vst [vmem:[%s430 + $0x8] sm:$0xff] %v532
    %536 = vst [vmem:[%s430 + $0x10] sm:$0xff] %v533
    %v537 = vsub.f32 %v107, 6.25
    %v538 = vsub.f32 %v108, 6.25
    %v539 = vsub.f32 %v109, 6.25
    %v540 = vsub.f32 %v110, 6.25
    %v541 = vsub.f32 %v111, 6.25
    %v542 = vsub.f32 %v112, 6.25
    %v543 = vsub.f32 %v113, 6.25
    %v544 = vsub.f32 %v114, 6.25
    %v545 = vsub.f32 %v115, 6.25
    %v546 = vsub.f32 %v116, 6.25
    %v547 = vsub.f32 %v117, 6.25
    %v548 = vsub.f32 %v118, 6.25
    %v549 = vsub.f32 %v119, 6.25
    %v550 = vsub.f32 %v120, 6.25
    %v551 = vsub.f32 %v121, 6.25
    %v552 = vsub.f32 %v122, 6.25
    %v553 = vsub.f32 %v123, 6.25
    %v554 = vsub.f32 %v124, 6.25
    %v555 = vsub.f32 %v125, 6.25
    %v556 = vsub.f32 %v126, 6.25
    %v557 = vsub.f32 %v127, 6.25
    %v558 = vsub.f32 %v128, 6.25
    %v559 = vsub.f32 %v129, 6.25
    %v560 = vsub.f32 %v130, 6.25
    %v561 = vtanh.pop %v537
    %v562 = vtanh.pop %v538
    %v563 = vtanh.pop %v539
    %v564 = vtanh.pop %v540
    %v565 = vtanh.pop %v541
    %v566 = vtanh.pop %v542
    %v567 = vtanh.pop %v543
    %v568 = vtanh.pop %v544
    %v569 = vtanh.pop %v545
    %v570 = vtanh.pop %v546
    %v571 = vtanh.pop %v547
    %v572 = vtanh.pop %v548
    %v573 = vtanh.pop %v549
    %v574 = vtanh.pop %v550
    %v575 = vtanh.pop %v551
    %v576 = vtanh.pop %v552
    %v577 = vtanh.pop %v553
    %v578 = vtanh.pop %v554
    %v579 = vtanh.pop %v555
    %v580 = vtanh.pop %v556
    %v581 = vtanh.pop %v557
    %v582 = vtanh.pop %v558
    %v583 = vtanh.pop %v559
    %v584 = vtanh.pop %v560
    %v585 = vadd.f32 %v561, %v562
    %v586 = vadd.f32 %v585, %v563
    %v587 = vadd.f32 %v586, %v564
    %v588 = vadd.f32 %v587, %v565
    %v589 = vadd.f32 %v588, %v566
    %v590 = vadd.f32 %v589, %v567
    %v591 = vadd.f32 %v590, %v568
    %v592 = vadd.f32 %v569, %v570
    %v593 = vadd.f32 %v592, %v571
    %v594 = vadd.f32 %v593, %v572
    %v595 = vadd.f32 %v594, %v573
    %v596 = vadd.f32 %v595, %v574
    %v597 = vadd.f32 %v596, %v575
    %v598 = vadd.f32 %v597, %v576
    %v599 = vadd.f32 %v577, %v578
    %v600 = vadd.f32 %v599, %v579
    %v601 = vadd.f32 %v600, %v580
    %v602 = vadd.f32 %v601, %v581
    %v603 = vadd.f32 %v602, %v582
    %v604 = vadd.f32 %v603, %v583
    %v605 = vadd.f32 %v604, %v584
    %s606 = scalar_lea.vmem [#allocation5], 120
    %v607 = vld [vmem:[%s606] sm:$0xff]
    %v608 = vld [vmem:[%s606 + $0x8] sm:$0xff]
    %v609 = vld [vmem:[%s606 + $0x10] sm:$0xff]
    %v610 = vadd.f32 %v607, %v591
    %v611 = vadd.f32 %v608, %v598
    %v612 = vadd.f32 %v609, %v605
    %613 = vst [vmem:[%s606] sm:$0xff] %v610
    %614 = vst [vmem:[%s606 + $0x8] sm:$0xff] %v611
    %615 = vst [vmem:[%s606 + $0x10] sm:$0xff] %v612
    %v616 = vld [vmem:[%s518] sm:$0xff]
    %v617 = vld [vmem:[%s518 + $0x8] sm:$0xff]
    %v618 = vld [vmem:[%s518 + $0x10] sm:$0xff]
    %v619 = vsub.f32 %v616, %v591
    %v620 = vsub.f32 %v617, %v598
    %v621 = vsub.f32 %v618, %v605
    %622 = vst [vmem:[%s518] sm:$0xff] %v619
    %623 = vst [vmem:[%s518 + $0x8] sm:$0xff] %v620
    %624 = vst [vmem:[%s518 + $0x10] sm:$0xff] %v621
    %v625 = vsub.f32 %v107, 7.5
    %v626 = vsub.f32 %v108, 7.5
    %v627 = vsub.f32 %v109, 7.5
    %v628 = vsub.f32 %v110, 7.5
    %v629 = vsub.f32 %v111, 7.5
    %v630 = vsub.f32 %v112, 7.5
    %v631 = vsub.f32 %v113, 7.5
    %v632 = vsub.f32 %v114, 7.5
    %v633 = vsub.f32 %v115, 7.5
    %v634 = vsub.f32 %v116, 7.5
    %v635 = vsub.f32 %v117, 7.5
    %v636 = vsub.f32 %v118, 7.5
    %v637 = vsub.f32 %v119, 7.5
    %v638 = vsub.f32 %v120, 7.5
    %v639 = vsub.f32 %v121, 7.5
    %v640 = vsub.f32 %v122, 7.5
    %v641 = vsub.f32 %v123, 7.5
    %v642 = vsub.f32 %v124, 7.5
    %v643 = vsub.f32 %v125, 7.5
    %v644 = vsub.f32 %v126, 7.5
    %v645 = vsub.f32 %v127, 7.5
    %v646 = vsub.f32 %v128, 7.5
    %v647 = vsub.f32 %v129, 7.5
    %v648 = vsub.f32 %v130, 7.5
    %v649 = vtanh.pop %v625
    %v650 = vtanh.pop %v626
    %v651 = vtanh.pop %v627
    %v652 = vtanh.pop %v628
    %v653 = vtanh.pop %v629
    %v654 = vtanh.pop %v630
    %v655 = vtanh.pop %v631
    %v656 = vtanh.pop %v632
    %v657 = vtanh.pop %v633
    %v658 = vtanh.pop %v634
    %v659 = vtanh.pop %v635
    %v660 = vtanh.pop %v636
    %v661 = vtanh.pop %v637
    %v662 = vtanh.pop %v638
    %v663 = vtanh.pop %v639
    %v664 = vtanh.pop %v640
    %v665 = vtanh.pop %v641
    %v666 = vtanh.pop %v642
    %v667 = vtanh.pop %v643
    %v668 = vtanh.pop %v644
    %v669 = vtanh.pop %v645
    %v670 = vtanh.pop %v646
    %v671 = vtanh.pop %v647
    %v672 = vtanh.pop %v648
    %v673 = vadd.f32 %v649, %v650
    %v674 = vadd.f32 %v673, %v651
    %v675 = vadd.f32 %v674, %v652
    %v676 = vadd.f32 %v675, %v653
    %v677 = vadd.f32 %v676, %v654
    %v678 = vadd.f32 %v677, %v655
    %v679 = vadd.f32 %v678, %v656
    %v680 = vadd.f32 %v657, %v658
    %v681 = vadd.f32 %v680, %v659
    %v682 = vadd.f32 %v681, %v660
    %v683 = vadd.f32 %v682, %v661
    %v684 = vadd.f32 %v683, %v662
    %v685 = vadd.f32 %v684, %v663
    %v686 = vadd.f32 %v685, %v664
    %v687 = vadd.f32 %v665, %v666
    %v688 = vadd.f32 %v687, %v667
    %v689 = vadd.f32 %v688, %v668
    %v690 = vadd.f32 %v689, %v669
    %v691 = vadd.f32 %v690, %v670
    %v692 = vadd.f32 %v691, %v671
    %v693 = vadd.f32 %v692, %v672
    %s694 = scalar_lea.vmem [#allocation5], 144
    %v695 = vld [vmem:[%s694] sm:$0xff]
    %v696 = vld [vmem:[%s694 + $0x8] sm:$0xff]
    %v697 = vld [vmem:[%s694 + $0x10] sm:$0xff]
    %v698 = vadd.f32 %v695, %v679
    %v699 = vadd.f32 %v696, %v686
    %v700 = vadd.f32 %v697, %v693
    %701 = vst [vmem:[%s694] sm:$0xff] %v698
    %702 = vst [vmem:[%s694 + $0x8] sm:$0xff] %v699
    %703 = vst [vmem:[%s694 + $0x10] sm:$0xff] %v700
    %v704 = vld [vmem:[%s606] sm:$0xff]
    %v705 = vld [vmem:[%s606 + $0x8] sm:$0xff]
    %v706 = vld [vmem:[%s606 + $0x10] sm:$0xff]
    %v707 = vsub.f32 %v704, %v679
    %v708 = vsub.f32 %v705, %v686
    %v709 = vsub.f32 %v706, %v693
    %710 = vst [vmem:[%s606] sm:$0xff] %v707
    %711 = vst [vmem:[%s606 + $0x8] sm:$0xff] %v708
    %712 = vst [vmem:[%s606 + $0x10] sm:$0xff] %v709
    %v713 = vsub.f32 %v107, 8.75
    %v714 = vsub.f32 %v108, 8.75
    %v715 = vsub.f32 %v109, 8.75
    %v716 = vsub.f32 %v110, 8.75
    %v717 = vsub.f32 %v111, 8.75
    %v718 = vsub.f32 %v112, 8.75
    %v719 = vsub.f32 %v113, 8.75
    %v720 = vsub.f32 %v114, 8.75
    %v721 = vsub.f32 %v115, 8.75
    %v722 = vsub.f32 %v116, 8.75
    %v723 = vsub.f32 %v117, 8.75
    %v724 = vsub.f32 %v118, 8.75
    %v725 = vsub.f32 %v119, 8.75
    %v726 = vsub.f32 %v120, 8.75
    %v727 = vsub.f32 %v121, 8.75
    %v728 = vsub.f32 %v122, 8.75
    %v729 = vsub.f32 %v123, 8.75
    %v730 = vsub.f32 %v124, 8.75
    %v731 = vsub.f32 %v125, 8.75
    %v732 = vsub.f32 %v126, 8.75
    %v733 = vsub.f32 %v127, 8.75
    %v734 = vsub.f32 %v128, 8.75
    %v735 = vsub.f32 %v129, 8.75
    %v736 = vsub.f32 %v130, 8.75
    %v737 = vtanh.pop %v713
    %v738 = vtanh.pop %v714
    %v739 = vtanh.pop %v715
    %v740 = vtanh.pop %v716
    %v741 = vtanh.pop %v717
    %v742 = vtanh.pop %v718
    %v743 = vtanh.pop %v719
    %v744 = vtanh.pop %v720
    %v745 = vtanh.pop %v721
    %v746 = vtanh.pop %v722
    %v747 = vtanh.pop %v723
    %v748 = vtanh.pop %v724
    %v749 = vtanh.pop %v725
    %v750 = vtanh.pop %v726
    %v751 = vtanh.pop %v727
    %v752 = vtanh.pop %v728
    %v753 = vtanh.pop %v729
    %v754 = vtanh.pop %v730
    %v755 = vtanh.pop %v731
    %v756 = vtanh.pop %v732
    %v757 = vtanh.pop %v733
    %v758 = vtanh.pop %v734
    %v759 = vtanh.pop %v735
    %v760 = vtanh.pop %v736
    %v761 = vadd.f32 %v737, %v738
    %v762 = vadd.f32 %v761, %v739
    %v763 = vadd.f32 %v762, %v740
    %v764 = vadd.f32 %v763, %v741
    %v765 = vadd.f32 %v764, %v742
    %v766 = vadd.f32 %v765, %v743
    %v767 = vadd.f32 %v766, %v744
    %v768 = vadd.f32 %v745, %v746
    %v769 = vadd.f32 %v768, %v747
    %v770 = vadd.f32 %v769, %v748
    %v771 = vadd.f32 %v770, %v749
    %v772 = vadd.f32 %v771, %v750
    %v773 = vadd.f32 %v772, %v751
    %v774 = vadd.f32 %v773, %v752
    %v775 = vadd.f32 %v753, %v754
    %v776 = vadd.f32 %v775, %v755
    %v777 = vadd.f32 %v776, %v756
    %v778 = vadd.f32 %v777, %v757
    %v779 = vadd.f32 %v778, %v758
    %v780 = vadd.f32 %v779, %v759
    %v781 = vadd.f32 %v780, %v760
    %s782 = scalar_lea.vmem [#allocation5], 168
    %v783 = vld [vmem:[%s782] sm:$0xff]
    %v784 = vld [vmem:[%s782 + $0x8] sm:$0xff]
    %v785 = vld [vmem:[%s782 + $0x10] sm:$0xff]
    %v786 = vadd.f32 %v783, %v767
    %v787 = vadd.f32 %v784, %v774
    %v788 = vadd.f32 %v785, %v781
    %789 = vst [vmem:[%s782] sm:$0xff] %v786
    %790 = vst [vmem:[%s782 + $0x8] sm:$0xff] %v787
    %791 = vst [vmem:[%s782 + $0x10] sm:$0xff] %v788
    %v792 = vld [vmem:[%s694] sm:$0xff]
    %v793 = vld [vmem:[%s694 + $0x8] sm:$0xff]
    %v794 = vld [vmem:[%s694 + $0x10] sm:$0xff]
    %v795 = vsub.f32 %v792, %v767
    %v796 = vsub.f32 %v793, %v774
    %v797 = vsub.f32 %v794, %v781
    %798 = vst [vmem:[%s694] sm:$0xff] %v795
    %799 = vst [vmem:[%s694 + $0x8] sm:$0xff] %v796
    %800 = vst [vmem:[%s694 + $0x10] sm:$0xff] %v797
    %v801 = vsub.f32 %v107, 10.0
    %v802 = vsub.f32 %v108, 10.0
    %v803 = vsub.f32 %v109, 10.0
    %v804 = vsub.f32 %v110, 10.0
    %v805 = vsub.f32 %v111, 10.0
    %v806 = vsub.f32 %v112, 10.0
    %v807 = vsub.f32 %v113, 10.0
    %v808 = vsub.f32 %v114, 10.0
    %v809 = vsub.f32 %v115, 10.0
    %v810 = vsub.f32 %v116, 10.0
    %v811 = vsub.f32 %v117, 10.0
    %v812 = vsub.f32 %v118, 10.0
    %v813 = vsub.f32 %v119, 10.0
    %v814 = vsub.f32 %v120, 10.0
    %v815 = vsub.f32 %v121, 10.0
    %v816 = vsub.f32 %v122, 10.0
    %v817 = vsub.f32 %v123, 10.0
    %v818 = vsub.f32 %v124, 10.0
    %v819 = vsub.f32 %v125, 10.0
    %v820 = vsub.f32 %v126, 10.0
    %v821 = vsub.f32 %v127, 10.0
    %v822 = vsub.f32 %v128, 10.0
    %v823 = vsub.f32 %v129, 10.0
    %v824 = vsub.f32 %v130, 10.0
    %v825 = vtanh.pop %v801
    %v826 = vtanh.pop %v802
    %v827 = vtanh.pop %v803
    %v828 = vtanh.pop %v804
    %v829 = vtanh.pop %v805
    %v830 = vtanh.pop %v806
    %v831 = vtanh.pop %v807
    %v832 = vtanh.pop %v808
    %v833 = vtanh.pop %v809
    %v834 = vtanh.pop %v810
    %v835 = vtanh.pop %v811
    %v836 = vtanh.pop %v812
    %v837 = vtanh.pop %v813
    %v838 = vtanh.pop %v814
    %v839 = vtanh.pop %v815
    %v840 = vtanh.pop %v816
    %v841 = vtanh.pop %v817
    %v842 = vtanh.pop %v818
    %v843 = vtanh.pop %v819
    %v844 = vtanh.pop %v820
    %v845 = vtanh.pop %v821
    %v846 = vtanh.pop %v822
    %v847 = vtanh.pop %v823
    %v848 = vtanh.pop %v824
    %v849 = vadd.f32 %v825, %v826
    %v850 = vadd.f32 %v849, %v827
    %v851 = vadd.f32 %v850, %v828
    %v852 = vadd.f32 %v851, %v829
    %v853 = vadd.f32 %v852, %v830
    %v854 = vadd.f32 %v853, %v831
    %v855 = vadd.f32 %v854, %v832
    %v856 = vadd.f32 %v833, %v834
    %v857 = vadd.f32 %v856, %v835
    %v858 = vadd.f32 %v857, %v836
    %v859 = vadd.f32 %v858, %v837
    %v860 = vadd.f32 %v859, %v838
    %v861 = vadd.f32 %v860, %v839
    %v862 = vadd.f32 %v861, %v840
    %v863 = vadd.f32 %v841, %v842
    %v864 = vadd.f32 %v863, %v843
    %v865 = vadd.f32 %v864, %v844
    %v866 = vadd.f32 %v865, %v845
    %v867 = vadd.f32 %v866, %v846
    %v868 = vadd.f32 %v867, %v847
    %v869 = vadd.f32 %v868, %v848
    %s870 = scalar_lea.vmem [#allocation5], 192
    %v871 = vld [vmem:[%s870] sm:$0xff]
    %v872 = vld [vmem:[%s870 + $0x8] sm:$0xff]
    %v873 = vld [vmem:[%s870 + $0x10] sm:$0xff]
    %v874 = vadd.f32 %v871, %v855
    %v875 = vadd.f32 %v872, %v862
    %v876 = vadd.f32 %v873, %v869
    %877 = vst [vmem:[%s870] sm:$0xff] %v874
    %878 = vst [vmem:[%s870 + $0x8] sm:$0xff] %v875
    %879 = vst [vmem:[%s870 + $0x10] sm:$0xff] %v876
    %v880 = vld [vmem:[%s782] sm:$0xff]
    %v881 = vld [vmem:[%s782 + $0x8] sm:$0xff]
    %v882 = vld [vmem:[%s782 + $0x10] sm:$0xff]
    %v883 = vsub.f32 %v880, %v855
    %v884 = vsub.f32 %v881, %v862
    %v885 = vsub.f32 %v882, %v869
    %886 = vst [vmem:[%s782] sm:$0xff] %v883
    %887 = vst [vmem:[%s782 + $0x8] sm:$0xff] %v884
    %888 = vst [vmem:[%s782 + $0x10] sm:$0xff] %v885
    %v889 = vsub.f32 %v107, 11.25
    %v890 = vsub.f32 %v108, 11.25
    %v891 = vsub.f32 %v109, 11.25
    %v892 = vsub.f32 %v110, 11.25
    %v893 = vsub.f32 %v111, 11.25
    %v894 = vsub.f32 %v112, 11.25
    %v895 = vsub.f32 %v113, 11.25
    %v896 = vsub.f32 %v114, 11.25
    %v897 = vsub.f32 %v115, 11.25
    %v898 = vsub.f32 %v116, 11.25
    %v899 = vsub.f32 %v117, 11.25
    %v900 = vsub.f32 %v118, 11.25
    %v901 = vsub.f32 %v119, 11.25
    %v902 = vsub.f32 %v120, 11.25
    %v903 = vsub.f32 %v121, 11.25
    %v904 = vsub.f32 %v122, 11.25
    %v905 = vsub.f32 %v123, 11.25
    %v906 = vsub.f32 %v124, 11.25
    %v907 = vsub.f32 %v125, 11.25
    %v908 = vsub.f32 %v126, 11.25
    %v909 = vsub.f32 %v127, 11.25
    %v910 = vsub.f32 %v128, 11.25
    %v911 = vsub.f32 %v129, 11.25
    %v912 = vsub.f32 %v130, 11.25
    %v913 = vtanh.pop %v889
    %v914 = vtanh.pop %v890
    %v915 = vtanh.pop %v891
    %v916 = vtanh.pop %v892
    %v917 = vtanh.pop %v893
    %v918 = vtanh.pop %v894
    %v919 = vtanh.pop %v895
    %v920 = vtanh.pop %v896
    %v921 = vtanh.pop %v897
    %v922 = vtanh.pop %v898
    %v923 = vtanh.pop %v899
    %v924 = vtanh.pop %v900
    %v925 = vtanh.pop %v901
    %v926 = vtanh.pop %v902
    %v927 = vtanh.pop %v903
    %v928 = vtanh.pop %v904
    %v929 = vtanh.pop %v905
    %v930 = vtanh.pop %v906
    %v931 = vtanh.pop %v907
    %v932 = vtanh.pop %v908
    %v933 = vtanh.pop %v909
    %v934 = vtanh.pop %v910
    %v935 = vtanh.pop %v911
    %v936 = vtanh.pop %v912
    %v937 = vadd.f32 %v913, %v914
    %v938 = vadd.f32 %v937, %v915
    %v939 = vadd.f32 %v938, %v916
    %v940 = vadd.f32 %v939, %v917
    %v941 = vadd.f32 %v940, %v918
    %v942 = vadd.f32 %v941, %v919
    %v943 = vadd.f32 %v942, %v920
    %v944 = vadd.f32 %v921, %v922
    %v945 = vadd.f32 %v944, %v923
    %v946 = vadd.f32 %v945, %v924
    %v947 = vadd.f32 %v946, %v925
    %v948 = vadd.f32 %v947, %v926
    %v949 = vadd.f32 %v948, %v927
    %v950 = vadd.f32 %v949, %v928
    %v951 = vadd.f32 %v929, %v930
    %v952 = vadd.f32 %v951, %v931
    %v953 = vadd.f32 %v952, %v932
    %v954 = vadd.f32 %v953, %v933
    %v955 = vadd.f32 %v954, %v934
    %v956 = vadd.f32 %v955, %v935
    %v957 = vadd.f32 %v956, %v936
    %s958 = scalar_lea.vmem [#allocation5], 216
    %v959 = vld [vmem:[%s958] sm:$0xff]
    %v960 = vld [vmem:[%s958 + $0x8] sm:$0xff]
    %v961 = vld [vmem:[%s958 + $0x10] sm:$0xff]
    %v962 = vadd.f32 %v959, %v943
    %v963 = vadd.f32 %v960, %v950
    %v964 = vadd.f32 %v961, %v957
    %965 = vst [vmem:[%s958] sm:$0xff] %v962
    %966 = vst [vmem:[%s958 + $0x8] sm:$0xff] %v963
    %967 = vst [vmem:[%s958 + $0x10] sm:$0xff] %v964
    %v968 = vld [vmem:[%s870] sm:$0xff]
    %v969 = vld [vmem:[%s870 + $0x8] sm:$0xff]
    %v970 = vld [vmem:[%s870 + $0x10] sm:$0xff]
    %v971 = vsub.f32 %v968, %v943
    %v972 = vsub.f32 %v969, %v950
    %v973 = vsub.f32 %v970, %v957
    %974 = vst [vmem:[%s870] sm:$0xff] %v971
    %975 = vst [vmem:[%s870 + $0x8] sm:$0xff] %v972
    %976 = vst [vmem:[%s870 + $0x10] sm:$0xff] %v973
    %v977 = vsub.f32 %v107, 12.5
    %v978 = vsub.f32 %v108, 12.5
    %v979 = vsub.f32 %v109, 12.5
    %v980 = vsub.f32 %v110, 12.5
    %v981 = vsub.f32 %v111, 12.5
    %v982 = vsub.f32 %v112, 12.5
    %v983 = vsub.f32 %v113, 12.5
    %v984 = vsub.f32 %v114, 12.5
    %v985 = vsub.f32 %v115, 12.5
    %v986 = vsub.f32 %v116, 12.5
    %v987 = vsub.f32 %v117, 12.5
    %v988 = vsub.f32 %v118, 12.5
    %v989 = vsub.f32 %v119, 12.5
    %v990 = vsub.f32 %v120, 12.5
    %v991 = vsub.f32 %v121, 12.5
    %v992 = vsub.f32 %v122, 12.5
    %v993 = vsub.f32 %v123, 12.5
    %v994 = vsub.f32 %v124, 12.5
    %v995 = vsub.f32 %v125, 12.5
    %v996 = vsub.f32 %v126, 12.5
    %v997 = vsub.f32 %v127, 12.5
    %v998 = vsub.f32 %v128, 12.5
    %v999 = vsub.f32 %v129, 12.5
    %v1000 = vsub.f32 %v130, 12.5
    %v1001 = vtanh.pop %v977
    %v1002 = vtanh.pop %v978
    %v1003 = vtanh.pop %v979
    %v1004 = vtanh.pop %v980
    %v1005 = vtanh.pop %v981
    %v1006 = vtanh.pop %v982
    %v1007 = vtanh.pop %v983
    %v1008 = vtanh.pop %v984
    %v1009 = vtanh.pop %v985
    %v1010 = vtanh.pop %v986
    %v1011 = vtanh.pop %v987
    %v1012 = vtanh.pop %v988
    %v1013 = vtanh.pop %v989
    %v1014 = vtanh.pop %v990
    %v1015 = vtanh.pop %v991
    %v1016 = vtanh.pop %v992
    %v1017 = vtanh.pop %v993
    %v1018 = vtanh.pop %v994
    %v1019 = vtanh.pop %v995
    %v1020 = vtanh.pop %v996
    %v1021 = vtanh.pop %v997
    %v1022 = vtanh.pop %v998
    %v1023 = vtanh.pop %v999
    %v1024 = vtanh.pop %v1000
    %v1025 = vadd.f32 %v1001, %v1002
    %v1026 = vadd.f32 %v1025, %v1003
    %v1027 = vadd.f32 %v1026, %v1004
    %v1028 = vadd.f32 %v1027, %v1005
    %v1029 = vadd.f32 %v1028, %v1006
    %v1030 = vadd.f32 %v1029, %v1007
    %v1031 = vadd.f32 %v1030, %v1008
    %v1032 = vadd.f32 %v1009, %v1010
    %v1033 = vadd.f32 %v1032, %v1011
    %v1034 = vadd.f32 %v1033, %v1012
    %v1035 = vadd.f32 %v1034, %v1013
    %v1036 = vadd.f32 %v1035, %v1014
    %v1037 = vadd.f32 %v1036, %v1015
    %v1038 = vadd.f32 %v1037, %v1016
    %v1039 = vadd.f32 %v1017, %v1018
    %v1040 = vadd.f32 %v1039, %v1019
    %v1041 = vadd.f32 %v1040, %v1020
    %v1042 = vadd.f32 %v1041, %v1021
    %v1043 = vadd.f32 %v1042, %v1022
    %v1044 = vadd.f32 %v1043, %v1023
    %v1045 = vadd.f32 %v1044, %v1024
    %s1046 = scalar_lea.vmem [#allocation5], 240
    %v1047 = vld [vmem:[%s1046] sm:$0xff]
    %v1048 = vld [vmem:[%s1046 + $0x8] sm:$0xff]
    %v1049 = vld [vmem:[%s1046 + $0x10] sm:$0xff]
    %v1050 = vadd.f32 %v1047, %v1031
    %v1051 = vadd.f32 %v1048, %v1038
    %v1052 = vadd.f32 %v1049, %v1045
    %1053 = vst [vmem:[%s1046] sm:$0xff] %v1050
    %1054 = vst [vmem:[%s1046 + $0x8] sm:$0xff] %v1051
    %1055 = vst [vmem:[%s1046 + $0x10] sm:$0xff] %v1052
    %v1056 = vld [vmem:[%s958] sm:$0xff]
    %v1057 = vld [vmem:[%s958 + $0x8] sm:$0xff]
    %v1058 = vld [vmem:[%s958 + $0x10] sm:$0xff]
    %v1059 = vsub.f32 %v1056, %v1031
    %v1060 = vsub.f32 %v1057, %v1038
    %v1061 = vsub.f32 %v1058, %v1045
    %1062 = vst [vmem:[%s958] sm:$0xff] %v1059
    %1063 = vst [vmem:[%s958 + $0x8] sm:$0xff] %v1060
    %1064 = vst [vmem:[%s958 + $0x10] sm:$0xff] %v1061
    %v1065 = vsub.f32 %v107, 13.75
    %v1066 = vsub.f32 %v108, 13.75
    %v1067 = vsub.f32 %v109, 13.75
    %v1068 = vsub.f32 %v110, 13.75
    %v1069 = vsub.f32 %v111, 13.75
    %v1070 = vsub.f32 %v112, 13.75
    %v1071 = vsub.f32 %v113, 13.75
    %v1072 = vsub.f32 %v114, 13.75
    %v1073 = vsub.f32 %v115, 13.75
    %v1074 = vsub.f32 %v116, 13.75
    %v1075 = vsub.f32 %v117, 13.75
    %v1076 = vsub.f32 %v118, 13.75
    %v1077 = vsub.f32 %v119, 13.75
    %v1078 = vsub.f32 %v120, 13.75
    %v1079 = vsub.f32 %v121, 13.75
    %v1080 = vsub.f32 %v122, 13.75
    %v1081 = vsub.f32 %v123, 13.75
    %v1082 = vsub.f32 %v124, 13.75
    %v1083 = vsub.f32 %v125, 13.75
    %v1084 = vsub.f32 %v126, 13.75
    %v1085 = vsub.f32 %v127, 13.75
    %v1086 = vsub.f32 %v128, 13.75
    %v1087 = vsub.f32 %v129, 13.75
    %v1088 = vsub.f32 %v130, 13.75
    %v1089 = vtanh.pop %v1065
    %v1090 = vtanh.pop %v1066
    %v1091 = vtanh.pop %v1067
    %v1092 = vtanh.pop %v1068
    %v1093 = vtanh.pop %v1069
    %v1094 = vtanh.pop %v1070
    %v1095 = vtanh.pop %v1071
    %v1096 = vtanh.pop %v1072
    %v1097 = vtanh.pop %v1073
    %v1098 = vtanh.pop %v1074
    %v1099 = vtanh.pop %v1075
    %v1100 = vtanh.pop %v1076
    %v1101 = vtanh.pop %v1077
    %v1102 = vtanh.pop %v1078
    %v1103 = vtanh.pop %v1079
    %v1104 = vtanh.pop %v1080
    %v1105 = vtanh.pop %v1081
    %v1106 = vtanh.pop %v1082
    %v1107 = vtanh.pop %v1083
    %v1108 = vtanh.pop %v1084
    %v1109 = vtanh.pop %v1085
    %v1110 = vtanh.pop %v1086
    %v1111 = vtanh.pop %v1087
    %v1112 = vtanh.pop %v1088
    %v1113 = vadd.f32 %v1089, %v1090
    %v1114 = vadd.f32 %v1113, %v1091
    %v1115 = vadd.f32 %v1114, %v1092
    %v1116 = vadd.f32 %v1115, %v1093
    %v1117 = vadd.f32 %v1116, %v1094
    %v1118 = vadd.f32 %v1117, %v1095
    %v1119 = vadd.f32 %v1118, %v1096
    %v1120 = vadd.f32 %v1097, %v1098
    %v1121 = vadd.f32 %v1120, %v1099
    %v1122 = vadd.f32 %v1121, %v1100
    %v1123 = vadd.f32 %v1122, %v1101
    %v1124 = vadd.f32 %v1123, %v1102
    %v1125 = vadd.f32 %v1124, %v1103
    %v1126 = vadd.f32 %v1125, %v1104
    %v1127 = vadd.f32 %v1105, %v1106
    %v1128 = vadd.f32 %v1127, %v1107
    %v1129 = vadd.f32 %v1128, %v1108
    %v1130 = vadd.f32 %v1129, %v1109
    %v1131 = vadd.f32 %v1130, %v1110
    %v1132 = vadd.f32 %v1131, %v1111
    %v1133 = vadd.f32 %v1132, %v1112
    %s1134 = scalar_lea.vmem [#allocation5], 264
    %v1135 = vld [vmem:[%s1134] sm:$0xff]
    %v1136 = vld [vmem:[%s1134 + $0x8] sm:$0xff]
    %v1137 = vld [vmem:[%s1134 + $0x10] sm:$0xff]
    %v1138 = vadd.f32 %v1135, %v1119
    %v1139 = vadd.f32 %v1136, %v1126
    %v1140 = vadd.f32 %v1137, %v1133
    %1141 = vst [vmem:[%s1134] sm:$0xff] %v1138
    %1142 = vst [vmem:[%s1134 + $0x8] sm:$0xff] %v1139
    %1143 = vst [vmem:[%s1134 + $0x10] sm:$0xff] %v1140
    %v1144 = vld [vmem:[%s1046] sm:$0xff]
    %v1145 = vld [vmem:[%s1046 + $0x8] sm:$0xff]
    %v1146 = vld [vmem:[%s1046 + $0x10] sm:$0xff]
    %v1147 = vsub.f32 %v1144, %v1119
    %v1148 = vsub.f32 %v1145, %v1126
    %v1149 = vsub.f32 %v1146, %v1133
    %1150 = vst [vmem:[%s1046] sm:$0xff] %v1147
    %1151 = vst [vmem:[%s1046 + $0x8] sm:$0xff] %v1148
    %1152 = vst [vmem:[%s1046 + $0x10] sm:$0xff] %v1149
    %v1153 = vsub.f32 %v107, 15.0
    %v1154 = vsub.f32 %v108, 15.0
    %v1155 = vsub.f32 %v109, 15.0
    %v1156 = vsub.f32 %v110, 15.0
    %v1157 = vsub.f32 %v111, 15.0
    %v1158 = vsub.f32 %v112, 15.0
    %v1159 = vsub.f32 %v113, 15.0
    %v1160 = vsub.f32 %v114, 15.0
    %v1161 = vsub.f32 %v115, 15.0
    %v1162 = vsub.f32 %v116, 15.0
    %v1163 = vsub.f32 %v117, 15.0
    %v1164 = vsub.f32 %v118, 15.0
    %v1165 = vsub.f32 %v119, 15.0
    %v1166 = vsub.f32 %v120, 15.0
    %v1167 = vsub.f32 %v121, 15.0
    %v1168 = vsub.f32 %v122, 15.0
    %v1169 = vsub.f32 %v123, 15.0
    %v1170 = vsub.f32 %v124, 15.0
    %v1171 = vsub.f32 %v125, 15.0
    %v1172 = vsub.f32 %v126, 15.0
    %v1173 = vsub.f32 %v127, 15.0
    %v1174 = vsub.f32 %v128, 15.0
    %v1175 = vsub.f32 %v129, 15.0
    %v1176 = vsub.f32 %v130, 15.0
    %v1177 = vtanh.pop %v1153
    %v1178 = vtanh.pop %v1154
    %v1179 = vtanh.pop %v1155
    %v1180 = vtanh.pop %v1156
    %v1181 = vtanh.pop %v1157
    %v1182 = vtanh.pop %v1158
    %v1183 = vtanh.pop %v1159
    %v1184 = vtanh.pop %v1160
    %v1185 = vtanh.pop %v1161
    %v1186 = vtanh.pop %v1162
    %v1187 = vtanh.pop %v1163
    %v1188 = vtanh.pop %v1164
    %v1189 = vtanh.pop %v1165
    %v1190 = vtanh.pop %v1166
    %v1191 = vtanh.pop %v1167
    %v1192 = vtanh.pop %v1168
    %v1193 = vtanh.pop %v1169
    %v1194 = vtanh.pop %v1170
    %v1195 = vtanh.pop %v1171
    %v1196 = vtanh.pop %v1172
    %v1197 = vtanh.pop %v1173
    %v1198 = vtanh.pop %v1174
    %v1199 = vtanh.pop %v1175
    %v1200 = vtanh.pop %v1176
    %v1201 = vadd.f32 %v1177, %v1178
    %v1202 = vadd.f32 %v1201, %v1179
    %v1203 = vadd.f32 %v1202, %v1180
    %v1204 = vadd.f32 %v1203, %v1181
    %v1205 = vadd.f32 %v1204, %v1182
    %v1206 = vadd.f32 %v1205, %v1183
    %v1207 = vadd.f32 %v1206, %v1184
    %v1208 = vadd.f32 %v1185, %v1186
    %v1209 = vadd.f32 %v1208, %v1187
    %v1210 = vadd.f32 %v1209, %v1188
    %v1211 = vadd.f32 %v1210, %v1189
    %v1212 = vadd.f32 %v1211, %v1190
    %v1213 = vadd.f32 %v1212, %v1191
    %v1214 = vadd.f32 %v1213, %v1192
    %v1215 = vadd.f32 %v1193, %v1194
    %v1216 = vadd.f32 %v1215, %v1195
    %v1217 = vadd.f32 %v1216, %v1196
    %v1218 = vadd.f32 %v1217, %v1197
    %v1219 = vadd.f32 %v1218, %v1198
    %v1220 = vadd.f32 %v1219, %v1199
    %v1221 = vadd.f32 %v1220, %v1200
    %s1222 = scalar_lea.vmem [#allocation5], 288
    %v1223 = vld [vmem:[%s1222] sm:$0xff]
    %v1224 = vld [vmem:[%s1222 + $0x8] sm:$0xff]
    %v1225 = vld [vmem:[%s1222 + $0x10] sm:$0xff]
    %v1226 = vadd.f32 %v1223, %v1207
    %v1227 = vadd.f32 %v1224, %v1214
    %v1228 = vadd.f32 %v1225, %v1221
    %1229 = vst [vmem:[%s1222] sm:$0xff] %v1226
    %1230 = vst [vmem:[%s1222 + $0x8] sm:$0xff] %v1227
    %1231 = vst [vmem:[%s1222 + $0x10] sm:$0xff] %v1228
    %v1232 = vld [vmem:[%s1134] sm:$0xff]
    %v1233 = vld [vmem:[%s1134 + $0x8] sm:$0xff]
    %v1234 = vld [vmem:[%s1134 + $0x10] sm:$0xff]
    %v1235 = vsub.f32 %v1232, %v1207
    %v1236 = vsub.f32 %v1233, %v1214
    %v1237 = vsub.f32 %v1234, %v1221
    %1238 = vst [vmem:[%s1134] sm:$0xff] %v1235
    %1239 = vst [vmem:[%s1134 + $0x8] sm:$0xff] %v1236
    %1240 = vst [vmem:[%s1134 + $0x10] sm:$0xff] %v1237
    %v1241 = vsub.f32 %v107, 16.25
    %v1242 = vsub.f32 %v108, 16.25
    %v1243 = vsub.f32 %v109, 16.25
    %v1244 = vsub.f32 %v110, 16.25
    %v1245 = vsub.f32 %v111, 16.25
    %v1246 = vsub.f32 %v112, 16.25
    %v1247 = vsub.f32 %v113, 16.25
    %v1248 = vsub.f32 %v114, 16.25
    %v1249 = vsub.f32 %v115, 16.25
    %v1250 = vsub.f32 %v116, 16.25
    %v1251 = vsub.f32 %v117, 16.25
    %v1252 = vsub.f32 %v118, 16.25
    %v1253 = vsub.f32 %v119, 16.25
    %v1254 = vsub.f32 %v120, 16.25
    %v1255 = vsub.f32 %v121, 16.25
    %v1256 = vsub.f32 %v122, 16.25
    %v1257 = vsub.f32 %v123, 16.25
    %v1258 = vsub.f32 %v124, 16.25
    %v1259 = vsub.f32 %v125, 16.25
    %v1260 = vsub.f32 %v126, 16.25
    %v1261 = vsub.f32 %v127, 16.25
    %v1262 = vsub.f32 %v128, 16.25
    %v1263 = vsub.f32 %v129, 16.25
    %v1264 = vsub.f32 %v130, 16.25
    %v1265 = vtanh.pop %v1241
    %v1266 = vtanh.pop %v1242
    %v1267 = vtanh.pop %v1243
    %v1268 = vtanh.pop %v1244
    %v1269 = vtanh.pop %v1245
    %v1270 = vtanh.pop %v1246
    %v1271 = vtanh.pop %v1247
    %v1272 = vtanh.pop %v1248
    %v1273 = vtanh.pop %v1249
    %v1274 = vtanh.pop %v1250
    %v1275 = vtanh.pop %v1251
    %v1276 = vtanh.pop %v1252
    %v1277 = vtanh.pop %v1253
    %v1278 = vtanh.pop %v1254
    %v1279 = vtanh.pop %v1255
    %v1280 = vtanh.pop %v1256
    %v1281 = vtanh.pop %v1257
    %v1282 = vtanh.pop %v1258
    %v1283 = vtanh.pop %v1259
    %v1284 = vtanh.pop %v1260
    %v1285 = vtanh.pop %v1261
    %v1286 = vtanh.pop %v1262
    %v1287 = vtanh.pop %v1263
    %v1288 = vtanh.pop %v1264
    %v1289 = vadd.f32 %v1265, %v1266
    %v1290 = vadd.f32 %v1289, %v1267
    %v1291 = vadd.f32 %v1290, %v1268
    %v1292 = vadd.f32 %v1291, %v1269
    %v1293 = vadd.f32 %v1292, %v1270
    %v1294 = vadd.f32 %v1293, %v1271
    %v1295 = vadd.f32 %v1294, %v1272
    %v1296 = vadd.f32 %v1273, %v1274
    %v1297 = vadd.f32 %v1296, %v1275
    %v1298 = vadd.f32 %v1297, %v1276
    %v1299 = vadd.f32 %v1298, %v1277
    %v1300 = vadd.f32 %v1299, %v1278
    %v1301 = vadd.f32 %v1300, %v1279
    %v1302 = vadd.f32 %v1301, %v1280
    %v1303 = vadd.f32 %v1281, %v1282
    %v1304 = vadd.f32 %v1303, %v1283
    %v1305 = vadd.f32 %v1304, %v1284
    %v1306 = vadd.f32 %v1305, %v1285
    %v1307 = vadd.f32 %v1306, %v1286
    %v1308 = vadd.f32 %v1307, %v1287
    %v1309 = vadd.f32 %v1308, %v1288
    %s1310 = scalar_lea.vmem [#allocation5], 312
    %v1311 = vld [vmem:[%s1310] sm:$0xff]
    %v1312 = vld [vmem:[%s1310 + $0x8] sm:$0xff]
    %v1313 = vld [vmem:[%s1310 + $0x10] sm:$0xff]
    %v1314 = vadd.f32 %v1311, %v1295
    %v1315 = vadd.f32 %v1312, %v1302
    %v1316 = vadd.f32 %v1313, %v1309
    %1317 = vst [vmem:[%s1310] sm:$0xff] %v1314
    %1318 = vst [vmem:[%s1310 + $0x8] sm:$0xff] %v1315
    %1319 = vst [vmem:[%s1310 + $0x10] sm:$0xff] %v1316
    %v1320 = vld [vmem:[%s1222] sm:$0xff]
    %v1321 = vld [vmem:[%s1222 + $0x8] sm:$0xff]
    %v1322 = vld [vmem:[%s1222 + $0x10] sm:$0xff]
    %v1323 = vsub.f32 %v1320, %v1295
    %v1324 = vsub.f32 %v1321, %v1302
    %v1325 = vsub.f32 %v1322, %v1309
    %1326 = vst [vmem:[%s1222] sm:$0xff] %v1323
    %1327 = vst [vmem:[%s1222 + $0x8] sm:$0xff] %v1324
    %1328 = vst [vmem:[%s1222 + $0x10] sm:$0xff] %v1325
    %v1329 = vsub.f32 %v107, 17.5
    %v1330 = vsub.f32 %v108, 17.5
    %v1331 = vsub.f32 %v109, 17.5
    %v1332 = vsub.f32 %v110, 17.5
    %v1333 = vsub.f32 %v111, 17.5
    %v1334 = vsub.f32 %v112, 17.5
    %v1335 = vsub.f32 %v113, 17.5
    %v1336 = vsub.f32 %v114, 17.5
    %v1337 = vsub.f32 %v115, 17.5
    %v1338 = vsub.f32 %v116, 17.5
    %v1339 = vsub.f32 %v117, 17.5
    %v1340 = vsub.f32 %v118, 17.5
    %v1341 = vsub.f32 %v119, 17.5
    %v1342 = vsub.f32 %v120, 17.5
    %v1343 = vsub.f32 %v121, 17.5
    %v1344 = vsub.f32 %v122, 17.5
    %v1345 = vsub.f32 %v123, 17.5
    %v1346 = vsub.f32 %v124, 17.5
    %v1347 = vsub.f32 %v125, 17.5
    %v1348 = vsub.f32 %v126, 17.5
    %v1349 = vsub.f32 %v127, 17.5
    %v1350 = vsub.f32 %v128, 17.5
    %v1351 = vsub.f32 %v129, 17.5
    %v1352 = vsub.f32 %v130, 17.5
    %v1353 = vtanh.pop %v1329
    %v1354 = vtanh.pop %v1330
    %v1355 = vtanh.pop %v1331
    %v1356 = vtanh.pop %v1332
    %v1357 = vtanh.pop %v1333
    %v1358 = vtanh.pop %v1334
    %v1359 = vtanh.pop %v1335
    %v1360 = vtanh.pop %v1336
    %v1361 = vtanh.pop %v1337
    %v1362 = vtanh.pop %v1338
    %v1363 = vtanh.pop %v1339
    %v1364 = vtanh.pop %v1340
    %v1365 = vtanh.pop %v1341
    %v1366 = vtanh.pop %v1342
    %v1367 = vtanh.pop %v1343
    %v1368 = vtanh.pop %v1344
    %v1369 = vtanh.pop %v1345
    %v1370 = vtanh.pop %v1346
    %v1371 = vtanh.pop %v1347
    %v1372 = vtanh.pop %v1348
    %v1373 = vtanh.pop %v1349
    %v1374 = vtanh.pop %v1350
    %v1375 = vtanh.pop %v1351
    %v1376 = vtanh.pop %v1352
    %v1377 = vadd.f32 %v1353, %v1354
    %v1378 = vadd.f32 %v1377, %v1355
    %v1379 = vadd.f32 %v1378, %v1356
    %v1380 = vadd.f32 %v1379, %v1357
    %v1381 = vadd.f32 %v1380, %v1358
    %v1382 = vadd.f32 %v1381, %v1359
    %v1383 = vadd.f32 %v1382, %v1360
    %v1384 = vadd.f32 %v1361, %v1362
    %v1385 = vadd.f32 %v1384, %v1363
    %v1386 = vadd.f32 %v1385, %v1364
    %v1387 = vadd.f32 %v1386, %v1365
    %v1388 = vadd.f32 %v1387, %v1366
    %v1389 = vadd.f32 %v1388, %v1367
    %v1390 = vadd.f32 %v1389, %v1368
    %v1391 = vadd.f32 %v1369, %v1370
    %v1392 = vadd.f32 %v1391, %v1371
    %v1393 = vadd.f32 %v1392, %v1372
    %v1394 = vadd.f32 %v1393, %v1373
    %v1395 = vadd.f32 %v1394, %v1374
    %v1396 = vadd.f32 %v1395, %v1375
    %v1397 = vadd.f32 %v1396, %v1376
    %s1398 = scalar_lea.vmem [#allocation5], 336
    %v1399 = vld [vmem:[%s1398] sm:$0xff]
    %v1400 = vld [vmem:[%s1398 + $0x8] sm:$0xff]
    %v1401 = vld [vmem:[%s1398 + $0x10] sm:$0xff]
    %v1402 = vadd.f32 %v1399, %v1383
    %v1403 = vadd.f32 %v1400, %v1390
    %v1404 = vadd.f32 %v1401, %v1397
    %1405 = vst [vmem:[%s1398] sm:$0xff] %v1402
    %1406 = vst [vmem:[%s1398 + $0x8] sm:$0xff] %v1403
    %1407 = vst [vmem:[%s1398 + $0x10] sm:$0xff] %v1404
    %v1408 = vld [vmem:[%s1310] sm:$0xff]
    %v1409 = vld [vmem:[%s1310 + $0x8] sm:$0xff]
    %v1410 = vld [vmem:[%s1310 + $0x10] sm:$0xff]
    %v1411 = vsub.f32 %v1408, %v1383
    %v1412 = vsub.f32 %v1409, %v1390
    %v1413 = vsub.f32 %v1410, %v1397
    %1414 = vst [vmem:[%s1310] sm:$0xff] %v1411
    %1415 = vst [vmem:[%s1310 + $0x8] sm:$0xff] %v1412
    %1416 = vst [vmem:[%s1310 + $0x10] sm:$0xff] %v1413
    %v1417 = vsub.f32 %v107, 18.75
    %v1418 = vsub.f32 %v108, 18.75
    %v1419 = vsub.f32 %v109, 18.75
    %v1420 = vsub.f32 %v110, 18.75
    %v1421 = vsub.f32 %v111, 18.75
    %v1422 = vsub.f32 %v112, 18.75
    %v1423 = vsub.f32 %v113, 18.75
    %v1424 = vsub.f32 %v114, 18.75
    %v1425 = vsub.f32 %v115, 18.75
    %v1426 = vsub.f32 %v116, 18.75
    %v1427 = vsub.f32 %v117, 18.75
    %v1428 = vsub.f32 %v118, 18.75
    %v1429 = vsub.f32 %v119, 18.75
    %v1430 = vsub.f32 %v120, 18.75
    %v1431 = vsub.f32 %v121, 18.75
    %v1432 = vsub.f32 %v122, 18.75
    %v1433 = vsub.f32 %v123, 18.75
    %v1434 = vsub.f32 %v124, 18.75
    %v1435 = vsub.f32 %v125, 18.75
    %v1436 = vsub.f32 %v126, 18.75
    %v1437 = vsub.f32 %v127, 18.75
    %v1438 = vsub.f32 %v128, 18.75
    %v1439 = vsub.f32 %v129, 18.75
    %v1440 = vsub.f32 %v130, 18.75
    %v1441 = vtanh.pop %v1417
    %v1442 = vtanh.pop %v1418
    %v1443 = vtanh.pop %v1419
    %v1444 = vtanh.pop %v1420
    %v1445 = vtanh.pop %v1421
    %v1446 = vtanh.pop %v1422
    %v1447 = vtanh.pop %v1423
    %v1448 = vtanh.pop %v1424
    %v1449 = vtanh.pop %v1425
    %v1450 = vtanh.pop %v1426
    %v1451 = vtanh.pop %v1427
    %v1452 = vtanh.pop %v1428
    %v1453 = vtanh.pop %v1429
    %v1454 = vtanh.pop %v1430
    %v1455 = vtanh.pop %v1431
    %v1456 = vtanh.pop %v1432
    %v1457 = vtanh.pop %v1433
    %v1458 = vtanh.pop %v1434
    %v1459 = vtanh.pop %v1435
    %v1460 = vtanh.pop %v1436
    %v1461 = vtanh.pop %v1437
    %v1462 = vtanh.pop %v1438
    %v1463 = vtanh.pop %v1439
    %v1464 = vtanh.pop %v1440
    %v1465 = vadd.f32 %v1441, %v1442
    %v1466 = vadd.f32 %v1465, %v1443
    %v1467 = vadd.f32 %v1466, %v1444
    %v1468 = vadd.f32 %v1467, %v1445
    %v1469 = vadd.f32 %v1468, %v1446
    %v1470 = vadd.f32 %v1469, %v1447
    %v1471 = vadd.f32 %v1470, %v1448
    %v1472 = vadd.f32 %v1449, %v1450
    %v1473 = vadd.f32 %v1472, %v1451
    %v1474 = vadd.f32 %v1473, %v1452
    %v1475 = vadd.f32 %v1474, %v1453
    %v1476 = vadd.f32 %v1475, %v1454
    %v1477 = vadd.f32 %v1476, %v1455
    %v1478 = vadd.f32 %v1477, %v1456
    %v1479 = vadd.f32 %v1457, %v1458
    %v1480 = vadd.f32 %v1479, %v1459
    %v1481 = vadd.f32 %v1480, %v1460
    %v1482 = vadd.f32 %v1481, %v1461
    %v1483 = vadd.f32 %v1482, %v1462
    %v1484 = vadd.f32 %v1483, %v1463
    %v1485 = vadd.f32 %v1484, %v1464
    %s1486 = scalar_lea.vmem [#allocation5], 360
    %v1487 = vld [vmem:[%s1486] sm:$0xff]
    %v1488 = vld [vmem:[%s1486 + $0x8] sm:$0xff]
    %v1489 = vld [vmem:[%s1486 + $0x10] sm:$0xff]
    %v1490 = vadd.f32 %v1487, %v1471
    %v1491 = vadd.f32 %v1488, %v1478
    %v1492 = vadd.f32 %v1489, %v1485
    %1493 = vst [vmem:[%s1486] sm:$0xff] %v1490
    %1494 = vst [vmem:[%s1486 + $0x8] sm:$0xff] %v1491
    %1495 = vst [vmem:[%s1486 + $0x10] sm:$0xff] %v1492
    %v1496 = vld [vmem:[%s1398] sm:$0xff]
    %v1497 = vld [vmem:[%s1398 + $0x8] sm:$0xff]
    %v1498 = vld [vmem:[%s1398 + $0x10] sm:$0xff]
    %v1499 = vsub.f32 %v1496, %v1471
    %v1500 = vsub.f32 %v1497, %v1478
    %v1501 = vsub.f32 %v1498, %v1485
    %1502 = vst [vmem:[%s1398] sm:$0xff] %v1499
    %1503 = vst [vmem:[%s1398 + $0x8] sm:$0xff] %v1500
    %1504 = vst [vmem:[%s1398 + $0x10] sm:$0xff] %v1501
    %v1505 = vsub.f32 %v107, 20.0
    %v1506 = vsub.f32 %v108, 20.0
    %v1507 = vsub.f32 %v109, 20.0
    %v1508 = vsub.f32 %v110, 20.0
    %v1509 = vsub.f32 %v111, 20.0
    %v1510 = vsub.f32 %v112, 20.0
    %v1511 = vsub.f32 %v113, 20.0
    %v1512 = vsub.f32 %v114, 20.0
    %v1513 = vsub.f32 %v115, 20.0
    %v1514 = vsub.f32 %v116, 20.0
    %v1515 = vsub.f32 %v117, 20.0
    %v1516 = vsub.f32 %v118, 20.0
    %v1517 = vsub.f32 %v119, 20.0
    %v1518 = vsub.f32 %v120, 20.0
    %v1519 = vsub.f32 %v121, 20.0
    %v1520 = vsub.f32 %v122, 20.0
    %v1521 = vsub.f32 %v123, 20.0
    %v1522 = vsub.f32 %v124, 20.0
    %v1523 = vsub.f32 %v125, 20.0
    %v1524 = vsub.f32 %v126, 20.0
    %v1525 = vsub.f32 %v127, 20.0
    %v1526 = vsub.f32 %v128, 20.0
    %v1527 = vsub.f32 %v129, 20.0
    %v1528 = vsub.f32 %v130, 20.0
    %v1529 = vtanh.pop %v1505
    %v1530 = vtanh.pop %v1506
    %v1531 = vtanh.pop %v1507
    %v1532 = vtanh.pop %v1508
    %v1533 = vtanh.pop %v1509
    %v1534 = vtanh.pop %v1510
    %v1535 = vtanh.pop %v1511
    %v1536 = vtanh.pop %v1512
    %v1537 = vtanh.pop %v1513
    %v1538 = vtanh.pop %v1514
    %v1539 = vtanh.pop %v1515
    %v1540 = vtanh.pop %v1516
    %v1541 = vtanh.pop %v1517
    %v1542 = vtanh.pop %v1518
    %v1543 = vtanh.pop %v1519
    %v1544 = vtanh.pop %v1520
    %v1545 = vtanh.pop %v1521
    %v1546 = vtanh.pop %v1522
    %v1547 = vtanh.pop %v1523
    %v1548 = vtanh.pop %v1524
    %v1549 = vtanh.pop %v1525
    %v1550 = vtanh.pop %v1526
    %v1551 = vtanh.pop %v1527
    %v1552 = vtanh.pop %v1528
    %v1553 = vadd.f32 %v1529, %v1530
    %v1554 = vadd.f32 %v1553, %v1531
    %v1555 = vadd.f32 %v1554, %v1532
    %v1556 = vadd.f32 %v1555, %v1533
    %v1557 = vadd.f32 %v1556, %v1534
    %v1558 = vadd.f32 %v1557, %v1535
    %v1559 = vadd.f32 %v1558, %v1536
    %v1560 = vadd.f32 %v1537, %v1538
    %v1561 = vadd.f32 %v1560, %v1539
    %v1562 = vadd.f32 %v1561, %v1540
    %v1563 = vadd.f32 %v1562, %v1541
    %v1564 = vadd.f32 %v1563, %v1542
    %v1565 = vadd.f32 %v1564, %v1543
    %v1566 = vadd.f32 %v1565, %v1544
    %v1567 = vadd.f32 %v1545, %v1546
    %v1568 = vadd.f32 %v1567, %v1547
    %v1569 = vadd.f32 %v1568, %v1548
    %v1570 = vadd.f32 %v1569, %v1549
    %v1571 = vadd.f32 %v1570, %v1550
    %v1572 = vadd.f32 %v1571, %v1551
    %v1573 = vadd.f32 %v1572, %v1552
    %v1574 = vld [vmem:[%s1486] sm:$0xff]
    %v1575 = vld [vmem:[%s1486 + $0x8] sm:$0xff]
    %v1576 = vld [vmem:[%s1486 + $0x10] sm:$0xff]
    %v1577 = vsub.f32 %v1574, %v1559
    %v1578 = vsub.f32 %v1575, %v1566
    %v1579 = vsub.f32 %v1576, %v1573
    %1580 = vst [vmem:[%s1486] sm:$0xff] %v1577
    %1581 = vst [vmem:[%s1486 + $0x8] sm:$0xff] %v1578
    %1582 = vst [vmem:[%s1486 + $0x10] sm:$0xff] %v1579
    // Predicated region
    $region14: #{tpu_custom_call.1} parent=1 // pred_check
      _
    $region15: #{tpu_custom_call.1} parent=1 // pred_check_branch
      %1584 = sbr.rel (0) target = $region17
    $region16: #{tpu_custom_call.1} parent=1 // pred_region
      %s1586 = ssub.s32 6144, 6144
      %1587 = vsyncadd [#allocation4], %s1586
      %s1588 = sshll.u32 [#allocation5], 4
      %s1589 = int_to_ptr.vmem [resolvable:$true] %s1588
      %1594 = dma.vmem_to_hbm [thread:$0]  %s1589, 6144, %s1, [#allocation4], 128, 128, 8
    $region17: #{tpu_custom_call.1} parent=1 // pred_fallthru
      _
    // Predicated region
    $region18: #{tpu_custom_call.1} parent=1 // pred_check
      _
    $region19: #{tpu_custom_call.1} parent=1 // pred_check_branch
      %1596 = sbr.rel (0) target = $region21
    $region20: #{tpu_custom_call.1} parent=1 // pred_region
      %1597 = dma.done [#allocation4], 6144
    $region21: #{tpu_custom_call.1} parent=1 // pred_fallthru
      _
    %1598 = vsyncpa [#allocation3], 1
    %1599 = vsyncpa [#allocation4], 1

</llo_original>
